<compile_context>
chip_gen: v7x
topology: tpu7x:2x2x1
jax: 0.10.0
libtpu: 0.0.40
codegen_flags: <defaults>
</compile_context>

<pallas_src>
import jax
import jax.numpy as jnp
from jax import lax
from jax.experimental import pallas as pl
from jax.experimental.pallas import tpu as pltpu


# ----------------------------------------------------------------------------
# Fused kernel: BiLSTM final hidden (both directions) + self-attention.
#   x_ref    : [K, tile_n, E]  bf16  time-major embedded tokens, tile_n=tile_b*T
#   wih_ref  : [E, 8H]         bf16  input->gates, [fwd i f g o | bwd i f g o]
#   whh_ref  : [8H, 8H]        bf16  hidden->gates, nonzero rows only at the
#                                    g-lane positions (2H:3H fwd, 6H:7H bwd)
#   b_ref    : [1, 8H]         f32   b_ih + b_hh for both directions
#   wqkv_ref : [8H, 3D]        bf16  [Wq|Wk|Wv], rows at g-lane positions
#   bqkv_ref : [1, 3D]         f32
#   o_ref    : [tile_b, T, D]  f32   attention output C
#   xp_ref   : [K, tile_n, 8H] f32   VMEM scratch (hoisted input projection)
# ----------------------------------------------------------------------------
def utterance_encoder_kernel(x_ref, wih_ref, whh_ref, b_ref, wqkv_ref,
                             bqkv_ref, o_ref, xp_ref):
    K, tn, E = x_ref.shape
    tb, T, D = o_ref.shape
    H8 = wih_ref.shape[1]          # 8 * H (fwd 4H | bwd 4H) == 128 lanes
    H = H8 // 8

    # ---- hoisted input projection: K independent MXU matmuls --------------
    wih = wih_ref[...]                                         # bf16 [E, 8H]
    bias = jnp.broadcast_to(b_ref[...], (tn, H8))              # hoisted bcast

    def proj_body(t, carry):
        xp_ref[t] = jnp.dot(x_ref[t], wih,
                            preferred_element_type=jnp.float32) + bias
        return carry

    lax.fori_loop(0, K, proj_body, 0, unroll=True)

    # ---- static lane masks (built once, full [tn, 8H] to avoid per-iter
    #      broadcast_in_dim inside the loop) --------------------------------
    lane = lax.broadcasted_iota(jnp.int32, (tn, H8), 1)
    col = lane % (4 * H)                       # position within a direction
    is_g = (col >= 2 * H) & (col < 3 * H)      # g-gate lane positions
    is_fwd = lane < 4 * H                      # forward-direction lanes

    whh = whh_ref[...]                                         # bf16 [8H, 8H]

    # ---- fused fwd+bwd LSTM recurrence -------------------------------------
    # h / c are carried in the expanded 128-lane layout: real values live at
    # the g-lane positions (2H:3H fwd, 6H:7H bwd), everything else is zero.
    def step(t, carry):
        h_x, c_x = carry
        # forward reads time t, backward reads time K-1-t (lane select, no
        # sub-register slicing inside the serial loop)
        xp_t = jnp.where(is_fwd, xp_ref[t], xp_ref[K - 1 - t])
        gates = xp_t + jnp.dot(h_x.astype(jnp.bfloat16), whh,
                               preferred_element_type=jnp.float32)
        sig = jax.nn.sigmoid(gates)            # full 128-lane EUP
        th = jnp.tanh(gates)                   # full 128-lane EUP
        # XLU lane rotations align i / f / o onto the g-lane positions
        i_g = pltpu.roll(sig, 2 * H, 1)
        f_g = pltpu.roll(sig, H, 1)
        o_g = pltpu.roll(sig, 7 * H, 1)        # == shift by -H (circular)
        c_new = f_g * c_x + i_g * th           # valid at g-lanes
        h_new = jnp.where(is_g, o_g * jnp.tanh(c_new), 0.0)
        return h_new, c_new

    zeros = jnp.zeros((tn, H8), jnp.float32)
    h_x, _ = lax.fori_loop(0, K, step, (zeros, zeros), unroll=True)
    # h_x now holds [h_fwd_final | h_bwd_final] at the g-lane positions.

    # ---- self-attention tail (dropout = identity in eval mode) -------------
    # Wqkv is pre-expanded to the g-lane row layout, so no lane compaction of
    # h_x is needed before the QKV matmul.
    qkv = jnp.dot(h_x.astype(jnp.bfloat16), wqkv_ref[...],
                  preferred_element_type=jnp.float32) + bqkv_ref[...]
    inv_scale = 1.0 / (float(D) ** 0.5)
    q = (qkv[:, 0:D] * inv_scale).astype(jnp.bfloat16).reshape(tb, T, D)
    k = qkv[:, D:2 * D].astype(jnp.bfloat16).reshape(tb, T, D)
    v = qkv[:, 2 * D:3 * D].astype(jnp.bfloat16).reshape(tb, T, D)
    scores = jnp.einsum('btd,bsd->bts', q, k,
                        preferred_element_type=jnp.float32)
    probs = jax.nn.softmax(scores, axis=-1)
    ctx = jnp.einsum('bts,bsd->btd', probs.astype(jnp.bfloat16), v,
                     preferred_element_type=jnp.float32)
    o_ref[...] = ctx


def _pick_tile_b(B, T, cap=256):
    """Largest divisor of B whose tile (tile_b*T rows) is sublane-aligned and
    fits a ~cap-row tile (VMEM-safe on v7x); falls back to the smallest valid."""
    best = None
    for d in range(1, B + 1):
        if B % d != 0:
            continue
        if (d * T) % 8 != 0 and d != B:
            continue
        if d * T <= cap:
            best = d                      # keep the largest under the cap
        else:
            if best is None:
                best = d                  # nothing fits: smallest valid tile
            break
    return best if best is not None else B


def run_utterance_encoder(x_kne, params, B, T):
    """x_kne: bf16 [K, N, E] time-major embedded tokens, N = B*T."""
    K, N, E = x_kne.shape
    H8 = params['wih_cat'].shape[1]
    H = H8 // 8
    D = 2 * H

    tile_b = _pick_tile_b(B, T)
    tile_n = tile_b * T
    grid = (B // tile_b,)

    return pl.pallas_call(
        utterance_encoder_kernel,
        out_shape=jax.ShapeDtypeStruct((B, T, D), jnp.float32),
        grid_spec=pltpu.PrefetchScalarGridSpec(
            num_scalar_prefetch=0,
            grid=grid,
            in_specs=[
                pl.BlockSpec((K, tile_n, E), lambda i: (0, i, 0)),
                pl.BlockSpec((E, H8), lambda i: (0, 0)),      # resident weights
                pl.BlockSpec((H8, H8), lambda i: (0, 0)),
                pl.BlockSpec((1, H8), lambda i: (0, 0)),
                pl.BlockSpec((H8, 3 * D), lambda i: (0, 0)),
                pl.BlockSpec((1, 3 * D), lambda i: (0, 0)),
            ],
            out_specs=pl.BlockSpec((tile_b, T, D), lambda i: (i, 0, 0)),
            scratch_shapes=[pltpu.VMEM((K, tile_n, H8), jnp.float32)],
        ),
        compiler_params=pltpu.CompilerParams(
            dimension_semantics=("parallel",),
            vmem_limit_bytes=32 << 20,
        ),
    )(x_kne, params['wih_cat'], params['whh_x'], params['b_cat'],
      params['wqkv_x'], params['bqkv'])


# ----------------------------------------------------------------------------
# UtteranceEncoder forward (pretrained_model == 'none' path)
# ----------------------------------------------------------------------------
def utterance_encoder_forward(dialogues, params):
    """dialogues: int32 [B, T, K] token ids -> C: f32 [B, T, hidden_dim]."""
    B, T, K = dialogues.shape
    emb_table = params['embedding']                       # [V, E] f32

    # glue: embedding lookup (dropout = identity in eval mode).  Transpose the
    # small int32 token matrix BEFORE the gather so the embedded tensor is
    # produced time-major directly; cast to bf16 (MXU-native, halves DMA bytes).
    tokens_kn = dialogues.reshape(B * T, K).T             # [K, N] int32
    x_kne = jnp.take(emb_table, tokens_kn, axis=0).astype(jnp.bfloat16)

    return run_utterance_encoder(x_kne, params, B, T)


# ----------------------------------------------------------------------------
# Deterministic parameter initialization (layouts pre-arranged for the kernel)
# ----------------------------------------------------------------------------
def init_params(key, vocab_size, embedding_dim, hidden_dim):
    H = hidden_dim // 2          # per-direction LSTM hidden size
    D = hidden_dim
    keys = jax.random.split(key, 9)
    s = 0.1

    def rnd(k, shape):
        return (s * jax.random.normal(k, shape)).astype(jnp.float32)

    # input->gates for both directions, gate order i,f,g,o: [E, fwd 4H | bwd 4H]
    wih_cat = rnd(keys[1], (embedding_dim, 8 * H))

    # hidden->gates, embedded in a zero [8H, 8H] matrix: h values live at the
    # g-lane positions (rows 2H:3H fwd, 6H:7H bwd) inside the kernel.
    whh_f = rnd(keys[2], (H, 4 * H))
    whh_b = rnd(keys[3], (H, 4 * H))
    whh_x = jnp.zeros((8 * H, 8 * H), jnp.float32)
    whh_x = whh_x.at[2 * H:3 * H, 0:4 * H].set(whh_f)
    whh_x = whh_x.at[6 * H:7 * H, 4 * H:8 * H].set(whh_b)

    # fused self-attention projections [Wq|Wk|Wv] : [D, 3D], expanded to the
    # same g-lane row layout so the kernel can consume h without compaction.
    wq = rnd(keys[4], (D, D))
    wk = rnd(keys[5], (D, D))
    wv = rnd(keys[6], (D, D))
    wqkv = jnp.concatenate([wq, wk, wv], axis=1)          # [D, 3D]
    wqkv_x = jnp.zeros((8 * H, 3 * D), jnp.float32)
    wqkv_x = wqkv_x.at[2 * H:3 * H, :].set(wqkv[0:H, :])  # fwd-h rows
    wqkv_x = wqkv_x.at[6 * H:7 * H, :].set(wqkv[H:2 * H, :])  # bwd-h rows

    return {
        'embedding': rnd(keys[0], (vocab_size, embedding_dim)),
        'wih_cat': wih_cat.astype(jnp.bfloat16),
        'whh_x': whh_x.astype(jnp.bfloat16),
        'b_cat': rnd(keys[7], (1, 8 * H)),                # b_ih + b_hh, both dirs
        'wqkv_x': wqkv_x.astype(jnp.bfloat16),
        'bqkv': rnd(keys[8], (1, 3 * D)),
    }


if __name__ == "__main__":
    # Small shapes consistent with the module's forward:
    #   batch B=2, dialogue length T=8, tokens per utterance K=8,
    #   embedding_dim E=32, hidden_dim D=32 (LSTM hidden 16 per direction).
    B, T, K = 2, 8, 8
    vocab_size, embedding_dim, hidden_dim = 50, 32, 32

    key = jax.random.PRNGKey(0)
    pkey, dkey = jax.random.split(key)
    params = init_params(pkey, vocab_size, embedding_dim, hidden_dim)

    dialogues = jax.random.randint(dkey, (B, T, K), 0, vocab_size,
                                   dtype=jnp.int32)

    C = utterance_encoder_forward(dialogues, params)
    C = jax.block_until_ready(C)

    assert C.shape == (B, T, hidden_dim)
    assert bool(jnp.all(jnp.isfinite(C)))
    print("KERNEL_OK")
</pallas_src>

<mosaic_0001>
module attributes {stable_mosaic.version = 11 : i64} {
  func.func @utterance_encoder_kernel(%arg0: i32, %arg1: memref<8x16x32xbf16, #tpu.memory_space<vmem>>, %arg2: memref<32x128xbf16, #tpu.memory_space<vmem>>, %arg3: memref<128x128xbf16, #tpu.memory_space<vmem>>, %arg4: memref<1x128xf32, #tpu.memory_space<vmem>>, %arg5: memref<128x96xbf16, #tpu.memory_space<vmem>>, %arg6: memref<1x96xf32, #tpu.memory_space<vmem>>, %arg7: memref<2x8x32xf32, #tpu.memory_space<vmem>>, %arg8: memref<8x16x128xf32, #tpu.memory_space<vmem>>) attributes {dimension_semantics = [#tpu.dimension_semantics<parallel>], iteration_bounds = array<i64: 1>, scalar_prefetch = 0 : i64, scratch_operands = 1 : i64, tpu.core_type = #tpu.core_type<tc>, window_params = [{transform_indices = @transform_0, window_bounds = array<i64: 8, 16, 32>}, {pipeline_mode = #tpu.pipeline_mode<synchronous>, transform_indices = @transform_1, window_bounds = array<i64: 32, 128>}, {pipeline_mode = #tpu.pipeline_mode<synchronous>, transform_indices = @transform_2, window_bounds = array<i64: 128, 128>}, {pipeline_mode = #tpu.pipeline_mode<synchronous>, transform_indices = @transform_3, window_bounds = array<i64: 1, 128>}, {pipeline_mode = #tpu.pipeline_mode<synchronous>, transform_indices = @transform_4, window_bounds = array<i64: 128, 96>}, {pipeline_mode = #tpu.pipeline_mode<synchronous>, transform_indices = @transform_5, window_bounds = array<i64: 1, 96>}, {transform_indices = @transform_6, window_bounds = array<i64: 2, 8, 32>}]} {
    %c0 = arith.constant 0 : index
    %c0_0 = arith.constant 0 : index
    %0 = vector.load %arg2[%c0, %c0_0] : memref<32x128xbf16, #tpu.memory_space<vmem>>, vector<32x128xbf16>
    %c0_1 = arith.constant 0 : index
    %c0_2 = arith.constant 0 : index
    %1 = vector.load %arg4[%c0_1, %c0_2] : memref<1x128xf32, #tpu.memory_space<vmem>>, vector<1x128xf32>
    %2 = vector.shape_cast %1 : vector<1x128xf32> to vector<1x128xf32>
    %3 = vector.broadcast %2 : vector<1x128xf32> to vector<16x128xf32>
    %c0_i32 = arith.constant 0 : i32
    %4 = arith.index_cast %c0_i32 : i32 to index
    %c0_3 = arith.constant 0 : index
    %c0_4 = arith.constant 0 : index
    %5 = vector.load %arg1[%4, %c0_3, %c0_4] : memref<8x16x32xbf16, #tpu.memory_space<vmem>>, vector<1x16x32xbf16>
    %6 = vector.shape_cast %5 : vector<1x16x32xbf16> to vector<16x32xbf16>
    %cst = arith.constant dense<0.000000e+00> : vector<16x128xf32>
    %7 = tpu.matmul %6, %0, %cst {dimension_numbers = #tpu.dot_dimension_numbers<[1], [0], [0], [1], [0, 0, 1, 1], [], []>} : vector<16x32xbf16>, vector<32x128xbf16>, vector<16x128xf32> -> vector<16x128xf32>
    %8 = arith.addf %7, %3 : vector<16x128xf32>
    %9 = arith.index_cast %c0_i32 : i32 to index
    %c0_5 = arith.constant 0 : index
    %c0_6 = arith.constant 0 : index
    %10 = vector.load %arg8[%9, %c0_5, %c0_6] : memref<8x16x128xf32, #tpu.memory_space<vmem>>, vector<1x16x128xf32>
    %11 = vector.shape_cast %10 : vector<1x16x128xf32> to vector<16x128xf32>
    %12 = vector.shape_cast %8 : vector<16x128xf32> to vector<1x16x128xf32>
    tpu.vector_store %arg8[%9, %c0_5, %c0_6], %12 {strides = array<i32>} : memref<8x16x128xf32, #tpu.memory_space<vmem>>, vector<1x16x128xf32>,
    %c1_i32 = arith.constant 1 : i32
    %13 = arith.index_cast %c1_i32 : i32 to index
    %c0_7 = arith.constant 0 : index
    %c0_8 = arith.constant 0 : index
    %14 = vector.load %arg1[%13, %c0_7, %c0_8] : memref<8x16x32xbf16, #tpu.memory_space<vmem>>, vector<1x16x32xbf16>
    %15 = vector.shape_cast %14 : vector<1x16x32xbf16> to vector<16x32xbf16>
    %cst_9 = arith.constant dense<0.000000e+00> : vector<16x128xf32>
    %16 = tpu.matmul %15, %0, %cst_9 {dimension_numbers = #tpu.dot_dimension_numbers<[1], [0], [0], [1], [0, 0, 1, 1], [], []>} : vector<16x32xbf16>, vector<32x128xbf16>, vector<16x128xf32> -> vector<16x128xf32>
    %17 = arith.addf %16, %3 : vector<16x128xf32>
    %18 = arith.index_cast %c1_i32 : i32 to index
    %c0_10 = arith.constant 0 : index
    %c0_11 = arith.constant 0 : index
    %19 = vector.load %arg8[%18, %c0_10, %c0_11] : memref<8x16x128xf32, #tpu.memory_space<vmem>>, vector<1x16x128xf32>
    %20 = vector.shape_cast %19 : vector<1x16x128xf32> to vector<16x128xf32>
    %21 = vector.shape_cast %17 : vector<16x128xf32> to vector<1x16x128xf32>
    tpu.vector_store %arg8[%18, %c0_10, %c0_11], %21 {strides = array<i32>} : memref<8x16x128xf32, #tpu.memory_space<vmem>>, vector<1x16x128xf32>,
    %c2_i32 = arith.constant 2 : i32
    %22 = arith.index_cast %c2_i32 : i32 to index
    %c0_12 = arith.constant 0 : index
    %c0_13 = arith.constant 0 : index
    %23 = vector.load %arg1[%22, %c0_12, %c0_13] : memref<8x16x32xbf16, #tpu.memory_space<vmem>>, vector<1x16x32xbf16>
    %24 = vector.shape_cast %23 : vector<1x16x32xbf16> to vector<16x32xbf16>
    %cst_14 = arith.constant dense<0.000000e+00> : vector<16x128xf32>
    %25 = tpu.matmul %24, %0, %cst_14 {dimension_numbers = #tpu.dot_dimension_numbers<[1], [0], [0], [1], [0, 0, 1, 1], [], []>} : vector<16x32xbf16>, vector<32x128xbf16>, vector<16x128xf32> -> vector<16x128xf32>
    %26 = arith.addf %25, %3 : vector<16x128xf32>
    %27 = arith.index_cast %c2_i32 : i32 to index
    %c0_15 = arith.constant 0 : index
    %c0_16 = arith.constant 0 : index
    %28 = vector.load %arg8[%27, %c0_15, %c0_16] : memref<8x16x128xf32, #tpu.memory_space<vmem>>, vector<1x16x128xf32>
    %29 = vector.shape_cast %28 : vector<1x16x128xf32> to vector<16x128xf32>
    %30 = vector.shape_cast %26 : vector<16x128xf32> to vector<1x16x128xf32>
    tpu.vector_store %arg8[%27, %c0_15, %c0_16], %30 {strides = array<i32>} : memref<8x16x128xf32, #tpu.memory_space<vmem>>, vector<1x16x128xf32>,
    %c3_i32 = arith.constant 3 : i32
    %31 = arith.index_cast %c3_i32 : i32 to index
    %c0_17 = arith.constant 0 : index
    %c0_18 = arith.constant 0 : index
    %32 = vector.load %arg1[%31, %c0_17, %c0_18] : memref<8x16x32xbf16, #tpu.memory_space<vmem>>, vector<1x16x32xbf16>
    %33 = vector.shape_cast %32 : vector<1x16x32xbf16> to vector<16x32xbf16>
    %cst_19 = arith.constant dense<0.000000e+00> : vector<16x128xf32>
    %34 = tpu.matmul %33, %0, %cst_19 {dimension_numbers = #tpu.dot_dimension_numbers<[1], [0], [0], [1], [0, 0, 1, 1], [], []>} : vector<16x32xbf16>, vector<32x128xbf16>, vector<16x128xf32> -> vector<16x128xf32>
    %35 = arith.addf %34, %3 : vector<16x128xf32>
    %36 = arith.index_cast %c3_i32 : i32 to index
    %c0_20 = arith.constant 0 : index
    %c0_21 = arith.constant 0 : index
    %37 = vector.load %arg8[%36, %c0_20, %c0_21] : memref<8x16x128xf32, #tpu.memory_space<vmem>>, vector<1x16x128xf32>
    %38 = vector.shape_cast %37 : vector<1x16x128xf32> to vector<16x128xf32>
    %39 = vector.shape_cast %35 : vector<16x128xf32> to vector<1x16x128xf32>
    tpu.vector_store %arg8[%36, %c0_20, %c0_21], %39 {strides = array<i32>} : memref<8x16x128xf32, #tpu.memory_space<vmem>>, vector<1x16x128xf32>,
    %c4_i32 = arith.constant 4 : i32
    %40 = arith.index_cast %c4_i32 : i32 to index
    %c0_22 = arith.constant 0 : index
    %c0_23 = arith.constant 0 : index
    %41 = vector.load %arg1[%40, %c0_22, %c0_23] : memref<8x16x32xbf16, #tpu.memory_space<vmem>>, vector<1x16x32xbf16>
    %42 = vector.shape_cast %41 : vector<1x16x32xbf16> to vector<16x32xbf16>
    %cst_24 = arith.constant dense<0.000000e+00> : vector<16x128xf32>
    %43 = tpu.matmul %42, %0, %cst_24 {dimension_numbers = #tpu.dot_dimension_numbers<[1], [0], [0], [1], [0, 0, 1, 1], [], []>} : vector<16x32xbf16>, vector<32x128xbf16>, vector<16x128xf32> -> vector<16x128xf32>
    %44 = arith.addf %43, %3 : vector<16x128xf32>
    %45 = arith.index_cast %c4_i32 : i32 to index
    %c0_25 = arith.constant 0 : index
    %c0_26 = arith.constant 0 : index
    %46 = vector.load %arg8[%45, %c0_25, %c0_26] : memref<8x16x128xf32, #tpu.memory_space<vmem>>, vector<1x16x128xf32>
    %47 = vector.shape_cast %46 : vector<1x16x128xf32> to vector<16x128xf32>
    %48 = vector.shape_cast %44 : vector<16x128xf32> to vector<1x16x128xf32>
    tpu.vector_store %arg8[%45, %c0_25, %c0_26], %48 {strides = array<i32>} : memref<8x16x128xf32, #tpu.memory_space<vmem>>, vector<1x16x128xf32>,
    %c5_i32 = arith.constant 5 : i32
    %49 = arith.index_cast %c5_i32 : i32 to index
    %c0_27 = arith.constant 0 : index
    %c0_28 = arith.constant 0 : index
    %50 = vector.load %arg1[%49, %c0_27, %c0_28] : memref<8x16x32xbf16, #tpu.memory_space<vmem>>, vector<1x16x32xbf16>
    %51 = vector.shape_cast %50 : vector<1x16x32xbf16> to vector<16x32xbf16>
    %cst_29 = arith.constant dense<0.000000e+00> : vector<16x128xf32>
    %52 = tpu.matmul %51, %0, %cst_29 {dimension_numbers = #tpu.dot_dimension_numbers<[1], [0], [0], [1], [0, 0, 1, 1], [], []>} : vector<16x32xbf16>, vector<32x128xbf16>, vector<16x128xf32> -> vector<16x128xf32>
    %53 = arith.addf %52, %3 : vector<16x128xf32>
    %54 = arith.index_cast %c5_i32 : i32 to index
    %c0_30 = arith.constant 0 : index
    %c0_31 = arith.constant 0 : index
    %55 = vector.load %arg8[%54, %c0_30, %c0_31] : memref<8x16x128xf32, #tpu.memory_space<vmem>>, vector<1x16x128xf32>
    %56 = vector.shape_cast %55 : vector<1x16x128xf32> to vector<16x128xf32>
    %57 = vector.shape_cast %53 : vector<16x128xf32> to vector<1x16x128xf32>
    tpu.vector_store %arg8[%54, %c0_30, %c0_31], %57 {strides = array<i32>} : memref<8x16x128xf32, #tpu.memory_space<vmem>>, vector<1x16x128xf32>,
    %c6_i32 = arith.constant 6 : i32
    %58 = arith.index_cast %c6_i32 : i32 to index
    %c0_32 = arith.constant 0 : index
    %c0_33 = arith.constant 0 : index
    %59 = vector.load %arg1[%58, %c0_32, %c0_33] : memref<8x16x32xbf16, #tpu.memory_space<vmem>>, vector<1x16x32xbf16>
    %60 = vector.shape_cast %59 : vector<1x16x32xbf16> to vector<16x32xbf16>
    %cst_34 = arith.constant dense<0.000000e+00> : vector<16x128xf32>
    %61 = tpu.matmul %60, %0, %cst_34 {dimension_numbers = #tpu.dot_dimension_numbers<[1], [0], [0], [1], [0, 0, 1, 1], [], []>} : vector<16x32xbf16>, vector<32x128xbf16>, vector<16x128xf32> -> vector<16x128xf32>
    %62 = arith.addf %61, %3 : vector<16x128xf32>
    %63 = arith.index_cast %c6_i32 : i32 to index
    %c0_35 = arith.constant 0 : index
    %c0_36 = arith.constant 0 : index
    %64 = vector.load %arg8[%63, %c0_35, %c0_36] : memref<8x16x128xf32, #tpu.memory_space<vmem>>, vector<1x16x128xf32>
    %65 = vector.shape_cast %64 : vector<1x16x128xf32> to vector<16x128xf32>
    %66 = vector.shape_cast %62 : vector<16x128xf32> to vector<1x16x128xf32>
    tpu.vector_store %arg8[%63, %c0_35, %c0_36], %66 {strides = array<i32>} : memref<8x16x128xf32, #tpu.memory_space<vmem>>, vector<1x16x128xf32>,
    %c7_i32 = arith.constant 7 : i32
    %67 = arith.index_cast %c7_i32 : i32 to index
    %c0_37 = arith.constant 0 : index
    %c0_38 = arith.constant 0 : index
    %68 = vector.load %arg1[%67, %c0_37, %c0_38] : memref<8x16x32xbf16, #tpu.memory_space<vmem>>, vector<1x16x32xbf16>
    %69 = vector.shape_cast %68 : vector<1x16x32xbf16> to vector<16x32xbf16>
    %cst_39 = arith.constant dense<0.000000e+00> : vector<16x128xf32>
    %70 = tpu.matmul %69, %0, %cst_39 {dimension_numbers = #tpu.dot_dimension_numbers<[1], [0], [0], [1], [0, 0, 1, 1], [], []>} : vector<16x32xbf16>, vector<32x128xbf16>, vector<16x128xf32> -> vector<16x128xf32>
    %71 = arith.addf %70, %3 : vector<16x128xf32>
    %72 = arith.index_cast %c7_i32 : i32 to index
    %c0_40 = arith.constant 0 : index
    %c0_41 = arith.constant 0 : index
    %73 = vector.load %arg8[%72, %c0_40, %c0_41] : memref<8x16x128xf32, #tpu.memory_space<vmem>>, vector<1x16x128xf32>
    %74 = vector.shape_cast %73 : vector<1x16x128xf32> to vector<16x128xf32>
    %75 = vector.shape_cast %71 : vector<16x128xf32> to vector<1x16x128xf32>
    tpu.vector_store %arg8[%72, %c0_40, %c0_41], %75 {strides = array<i32>} : memref<8x16x128xf32, #tpu.memory_space<vmem>>, vector<1x16x128xf32>,
    %c8_i32 = arith.constant 8 : i32
    %76 = tpu.iota {dimensions = array<i32: 1>} : vector<16x128xi32>
    %c64_i32 = arith.constant 64 : i32
    %c0_i32_42 = arith.constant 0 : i32
    %77 = arith.cmpi eq, %c64_i32, %c0_i32_42 : i32
    %c1_i32_43 = arith.constant 1 : i32
    %78 = arith.select %77, %c1_i32_43, %c64_i32 : i32
    %79 = vector.broadcast %78 : i32 to vector<16x128xi32>
    %80 = arith.remsi %76, %79 : vector<16x128xi32>
    %c0_i32_44 = arith.constant 0 : i32
    %81 = vector.broadcast %c0_i32_44 : i32 to vector<16x128xi32>
    %82 = arith.cmpi ne, %80, %81 : vector<16x128xi32>
    %c0_i32_45 = arith.constant 0 : i32
    %83 = vector.broadcast %c0_i32_45 : i32 to vector<16x128xi32>
    %84 = arith.cmpi slt, %80, %83 : vector<16x128xi32>
    %c0_i32_46 = arith.constant 0 : i32
    %85 = arith.cmpi slt, %78, %c0_i32_46 : i32
    %86 = vector.broadcast %85 : i1 to vector<16x128xi1>
    %87 = vector.broadcast %86 : vector<16x128xi1> to vector<16x128xi1>
    %88 = arith.xori %84, %87 : vector<16x128xi1>
    %89 = arith.andi %88, %82 : vector<16x128xi1>
    %90 = vector.broadcast %78 : i32 to vector<16x128xi32>
    %91 = arith.addi %80, %90 : vector<16x128xi32>
    %92 = arith.select %89, %91, %80 : vector<16x128xi1>, vector<16x128xi32>
    %c32_i32 = arith.constant 32 : i32
    %93 = vector.broadcast %c32_i32 : i32 to vector<16x128xi32>
    %94 = arith.cmpi sge, %92, %93 : vector<16x128xi32>
    %c48_i32 = arith.constant 48 : i32
    %95 = vector.broadcast %c48_i32 : i32 to vector<16x128xi32>
    %96 = arith.cmpi slt, %92, %95 : vector<16x128xi32>
    %97 = arith.andi %94, %96 : vector<16x128xi1>
    %c64_i32_47 = arith.constant 64 : i32
    %98 = vector.broadcast %c64_i32_47 : i32 to vector<16x128xi32>
    %99 = arith.cmpi slt, %76, %98 : vector<16x128xi32>
    %c0_48 = arith.constant 0 : index
    %c0_49 = arith.constant 0 : index
    %100 = vector.load %arg3[%c0_48, %c0_49] : memref<128x128xbf16, #tpu.memory_space<vmem>>, vector<128x128xbf16>
    %cst_50 = arith.constant 0.000000e+00 : f32
    %101 = vector.broadcast %cst_50 : f32 to vector<16x128xf32>
    %c0_i32_51 = arith.constant 0 : i32
    %102 = arith.index_cast %c0_i32_51 : i32 to index
    %c0_52 = arith.constant 0 : index
    %c0_53 = arith.constant 0 : index
    %103 = vector.load %arg8[%102, %c0_52, %c0_53] : memref<8x16x128xf32, #tpu.memory_space<vmem>>, vector<1x16x128xf32>
    %104 = vector.shape_cast %103 : vector<1x16x128xf32> to vector<16x128xf32>
    %c7_i32_54 = arith.constant 7 : i32
    %105 = arith.subi %c7_i32_54, %c0_i32_51 : i32
    %106 = arith.index_cast %105 : i32 to index
    %c0_55 = arith.constant 0 : index
    %c0_56 = arith.constant 0 : index
    %107 = vector.load %arg8[%106, %c0_55, %c0_56] : memref<8x16x128xf32, #tpu.memory_space<vmem>>, vector<1x16x128xf32>
    %108 = vector.shape_cast %107 : vector<1x16x128xf32> to vector<16x128xf32>
    %109 = arith.select %99, %104, %108 : vector<16x128xi1>, vector<16x128xf32>
    %110 = arith.truncf %101 : vector<16x128xf32> to vector<16x128xbf16>
    %cst_57 = arith.constant dense<0.000000e+00> : vector<16x128xf32>
    %111 = tpu.matmul %110, %100, %cst_57 {dimension_numbers = #tpu.dot_dimension_numbers<[1], [0], [0], [1], [0, 0, 1, 1], [], []>} : vector<16x128xbf16>, vector<128x128xbf16>, vector<16x128xf32> -> vector<16x128xf32>
    %112 = arith.addf %109, %111 : vector<16x128xf32>
    %113 = arith.negf %112 : vector<16x128xf32>
    %114 = math.exp %113 : vector<16x128xf32>
    %cst_58 = arith.constant 1.000000e+00 : f32
    %115 = vector.broadcast %cst_58 : f32 to vector<16x128xf32>
    %116 = arith.addf %115, %114 : vector<16x128xf32>
    %117 = arith.divf %115, %116 : vector<16x128xf32>
    %118 = math.tanh %112 : vector<16x128xf32>
    %c32_i32_59 = arith.constant 32 : i32
    %119 = tpu.dynamic_rotate %117 by %c32_i32_59 dim 1 : vector<16x128xf32>, i32 -> vector<16x128xf32>
    %c16_i32 = arith.constant 16 : i32
    %120 = tpu.dynamic_rotate %117 by %c16_i32 dim 1 : vector<16x128xf32>, i32 -> vector<16x128xf32>
    %c112_i32 = arith.constant 112 : i32
    %121 = tpu.dynamic_rotate %117 by %c112_i32 dim 1 : vector<16x128xf32>, i32 -> vector<16x128xf32>
    %122 = arith.mulf %120, %101 : vector<16x128xf32>
    %123 = arith.mulf %119, %118 : vector<16x128xf32>
    %124 = arith.addf %122, %123 : vector<16x128xf32>
    %125 = math.tanh %124 : vector<16x128xf32>
    %126 = arith.mulf %121, %125 : vector<16x128xf32>
    %cst_60 = arith.constant 0.000000e+00 : f32
    %127 = vector.broadcast %cst_60 : f32 to vector<16x128xf32>
    %128 = arith.select %97, %126, %127 : vector<16x128xi1>, vector<16x128xf32>
    %c1_i32_61 = arith.constant 1 : i32
    %129 = arith.index_cast %c1_i32_61 : i32 to index
    %c0_62 = arith.constant 0 : index
    %c0_63 = arith.constant 0 : index
    %130 = vector.load %arg8[%129, %c0_62, %c0_63] : memref<8x16x128xf32, #tpu.memory_space<vmem>>, vector<1x16x128xf32>
    %131 = vector.shape_cast %130 : vector<1x16x128xf32> to vector<16x128xf32>
    %c7_i32_64 = arith.constant 7 : i32
    %132 = arith.subi %c7_i32_64, %c1_i32_61 : i32
    %133 = arith.index_cast %132 : i32 to index
    %c0_65 = arith.constant 0 : index
    %c0_66 = arith.constant 0 : index
    %134 = vector.load %arg8[%133, %c0_65, %c0_66] : memref<8x16x128xf32, #tpu.memory_space<vmem>>, vector<1x16x128xf32>
    %135 = vector.shape_cast %134 : vector<1x16x128xf32> to vector<16x128xf32>
    %136 = arith.select %99, %131, %135 : vector<16x128xi1>, vector<16x128xf32>
    %137 = arith.truncf %128 : vector<16x128xf32> to vector<16x128xbf16>
    %cst_67 = arith.constant dense<0.000000e+00> : vector<16x128xf32>
    %138 = tpu.matmul %137, %100, %cst_67 {dimension_numbers = #tpu.dot_dimension_numbers<[1], [0], [0], [1], [0, 0, 1, 1], [], []>} : vector<16x128xbf16>, vector<128x128xbf16>, vector<16x128xf32> -> vector<16x128xf32>
    %139 = arith.addf %136, %138 : vector<16x128xf32>
    %140 = arith.negf %139 : vector<16x128xf32>
    %141 = math.exp %140 : vector<16x128xf32>
    %cst_68 = arith.constant 1.000000e+00 : f32
    %142 = vector.broadcast %cst_68 : f32 to vector<16x128xf32>
    %143 = arith.addf %142, %141 : vector<16x128xf32>
    %144 = arith.divf %142, %143 : vector<16x128xf32>
    %145 = math.tanh %139 : vector<16x128xf32>
    %c32_i32_69 = arith.constant 32 : i32
    %146 = tpu.dynamic_rotate %144 by %c32_i32_69 dim 1 : vector<16x128xf32>, i32 -> vector<16x128xf32>
    %c16_i32_70 = arith.constant 16 : i32
    %147 = tpu.dynamic_rotate %144 by %c16_i32_70 dim 1 : vector<16x128xf32>, i32 -> vector<16x128xf32>
    %c112_i32_71 = arith.constant 112 : i32
    %148 = tpu.dynamic_rotate %144 by %c112_i32_71 dim 1 : vector<16x128xf32>, i32 -> vector<16x128xf32>
    %149 = arith.mulf %147, %124 : vector<16x128xf32>
    %150 = arith.mulf %146, %145 : vector<16x128xf32>
    %151 = arith.addf %149, %150 : vector<16x128xf32>
    %152 = math.tanh %151 : vector<16x128xf32>
    %153 = arith.mulf %148, %152 : vector<16x128xf32>
    %cst_72 = arith.constant 0.000000e+00 : f32
    %154 = vector.broadcast %cst_72 : f32 to vector<16x128xf32>
    %155 = arith.select %97, %153, %154 : vector<16x128xi1>, vector<16x128xf32>
    %c2_i32_73 = arith.constant 2 : i32
    %156 = arith.index_cast %c2_i32_73 : i32 to index
    %c0_74 = arith.constant 0 : index
    %c0_75 = arith.constant 0 : index
    %157 = vector.load %arg8[%156, %c0_74, %c0_75] : memref<8x16x128xf32, #tpu.memory_space<vmem>>, vector<1x16x128xf32>
    %158 = vector.shape_cast %157 : vector<1x16x128xf32> to vector<16x128xf32>
    %c7_i32_76 = arith.constant 7 : i32
    %159 = arith.subi %c7_i32_76, %c2_i32_73 : i32
    %160 = arith.index_cast %159 : i32 to index
    %c0_77 = arith.constant 0 : index
    %c0_78 = arith.constant 0 : index
    %161 = vector.load %arg8[%160, %c0_77, %c0_78] : memref<8x16x128xf32, #tpu.memory_space<vmem>>, vector<1x16x128xf32>
    %162 = vector.shape_cast %161 : vector<1x16x128xf32> to vector<16x128xf32>
    %163 = arith.select %99, %158, %162 : vector<16x128xi1>, vector<16x128xf32>
    %164 = arith.truncf %155 : vector<16x128xf32> to vector<16x128xbf16>
    %cst_79 = arith.constant dense<0.000000e+00> : vector<16x128xf32>
    %165 = tpu.matmul %164, %100, %cst_79 {dimension_numbers = #tpu.dot_dimension_numbers<[1], [0], [0], [1], [0, 0, 1, 1], [], []>} : vector<16x128xbf16>, vector<128x128xbf16>, vector<16x128xf32> -> vector<16x128xf32>
    %166 = arith.addf %163, %165 : vector<16x128xf32>
    %167 = arith.negf %166 : vector<16x128xf32>
    %168 = math.exp %167 : vector<16x128xf32>
    %cst_80 = arith.constant 1.000000e+00 : f32
    %169 = vector.broadcast %cst_80 : f32 to vector<16x128xf32>
    %170 = arith.addf %169, %168 : vector<16x128xf32>
    %171 = arith.divf %169, %170 : vector<16x128xf32>
    %172 = math.tanh %166 : vector<16x128xf32>
    %c32_i32_81 = arith.constant 32 : i32
    %173 = tpu.dynamic_rotate %171 by %c32_i32_81 dim 1 : vector<16x128xf32>, i32 -> vector<16x128xf32>
    %c16_i32_82 = arith.constant 16 : i32
    %174 = tpu.dynamic_rotate %171 by %c16_i32_82 dim 1 : vector<16x128xf32>, i32 -> vector<16x128xf32>
    %c112_i32_83 = arith.constant 112 : i32
    %175 = tpu.dynamic_rotate %171 by %c112_i32_83 dim 1 : vector<16x128xf32>, i32 -> vector<16x128xf32>
    %176 = arith.mulf %174, %151 : vector<16x128xf32>
    %177 = arith.mulf %173, %172 : vector<16x128xf32>
    %178 = arith.addf %176, %177 : vector<16x128xf32>
    %179 = math.tanh %178 : vector<16x128xf32>
    %180 = arith.mulf %175, %179 : vector<16x128xf32>
    %cst_84 = arith.constant 0.000000e+00 : f32
    %181 = vector.broadcast %cst_84 : f32 to vector<16x128xf32>
    %182 = arith.select %97, %180, %181 : vector<16x128xi1>, vector<16x128xf32>
    %c3_i32_85 = arith.constant 3 : i32
    %183 = arith.index_cast %c3_i32_85 : i32 to index
    %c0_86 = arith.constant 0 : index
    %c0_87 = arith.constant 0 : index
    %184 = vector.load %arg8[%183, %c0_86, %c0_87] : memref<8x16x128xf32, #tpu.memory_space<vmem>>, vector<1x16x128xf32>
    %185 = vector.shape_cast %184 : vector<1x16x128xf32> to vector<16x128xf32>
    %c7_i32_88 = arith.constant 7 : i32
    %186 = arith.subi %c7_i32_88, %c3_i32_85 : i32
    %187 = arith.index_cast %186 : i32 to index
    %c0_89 = arith.constant 0 : index
    %c0_90 = arith.constant 0 : index
    %188 = vector.load %arg8[%187, %c0_89, %c0_90] : memref<8x16x128xf32, #tpu.memory_space<vmem>>, vector<1x16x128xf32>
    %189 = vector.shape_cast %188 : vector<1x16x128xf32> to vector<16x128xf32>
    %190 = arith.select %99, %185, %189 : vector<16x128xi1>, vector<16x128xf32>
    %191 = arith.truncf %182 : vector<16x128xf32> to vector<16x128xbf16>
    %cst_91 = arith.constant dense<0.000000e+00> : vector<16x128xf32>
    %192 = tpu.matmul %191, %100, %cst_91 {dimension_numbers = #tpu.dot_dimension_numbers<[1], [0], [0], [1], [0, 0, 1, 1], [], []>} : vector<16x128xbf16>, vector<128x128xbf16>, vector<16x128xf32> -> vector<16x128xf32>
    %193 = arith.addf %190, %192 : vector<16x128xf32>
    %194 = arith.negf %193 : vector<16x128xf32>
    %195 = math.exp %194 : vector<16x128xf32>
    %cst_92 = arith.constant 1.000000e+00 : f32
    %196 = vector.broadcast %cst_92 : f32 to vector<16x128xf32>
    %197 = arith.addf %196, %195 : vector<16x128xf32>
    %198 = arith.divf %196, %197 : vector<16x128xf32>
    %199 = math.tanh %193 : vector<16x128xf32>
    %c32_i32_93 = arith.constant 32 : i32
    %200 = tpu.dynamic_rotate %198 by %c32_i32_93 dim 1 : vector<16x128xf32>, i32 -> vector<16x128xf32>
    %c16_i32_94 = arith.constant 16 : i32
    %201 = tpu.dynamic_rotate %198 by %c16_i32_94 dim 1 : vector<16x128xf32>, i32 -> vector<16x128xf32>
    %c112_i32_95 = arith.constant 112 : i32
    %202 = tpu.dynamic_rotate %198 by %c112_i32_95 dim 1 : vector<16x128xf32>, i32 -> vector<16x128xf32>
    %203 = arith.mulf %201, %178 : vector<16x128xf32>
    %204 = arith.mulf %200, %199 : vector<16x128xf32>
    %205 = arith.addf %203, %204 : vector<16x128xf32>
    %206 = math.tanh %205 : vector<16x128xf32>
    %207 = arith.mulf %202, %206 : vector<16x128xf32>
    %cst_96 = arith.constant 0.000000e+00 : f32
    %208 = vector.broadcast %cst_96 : f32 to vector<16x128xf32>
    %209 = arith.select %97, %207, %208 : vector<16x128xi1>, vector<16x128xf32>
    %c4_i32_97 = arith.constant 4 : i32
    %210 = arith.index_cast %c4_i32_97 : i32 to index
    %c0_98 = arith.constant 0 : index
    %c0_99 = arith.constant 0 : index
    %211 = vector.load %arg8[%210, %c0_98, %c0_99] : memref<8x16x128xf32, #tpu.memory_space<vmem>>, vector<1x16x128xf32>
    %212 = vector.shape_cast %211 : vector<1x16x128xf32> to vector<16x128xf32>
    %c7_i32_100 = arith.constant 7 : i32
    %213 = arith.subi %c7_i32_100, %c4_i32_97 : i32
    %214 = arith.index_cast %213 : i32 to index
    %c0_101 = arith.constant 0 : index
    %c0_102 = arith.constant 0 : index
    %215 = vector.load %arg8[%214, %c0_101, %c0_102] : memref<8x16x128xf32, #tpu.memory_space<vmem>>, vector<1x16x128xf32>
    %216 = vector.shape_cast %215 : vector<1x16x128xf32> to vector<16x128xf32>
    %217 = arith.select %99, %212, %216 : vector<16x128xi1>, vector<16x128xf32>
    %218 = arith.truncf %209 : vector<16x128xf32> to vector<16x128xbf16>
    %cst_103 = arith.constant dense<0.000000e+00> : vector<16x128xf32>
    %219 = tpu.matmul %218, %100, %cst_103 {dimension_numbers = #tpu.dot_dimension_numbers<[1], [0], [0], [1], [0, 0, 1, 1], [], []>} : vector<16x128xbf16>, vector<128x128xbf16>, vector<16x128xf32> -> vector<16x128xf32>
    %220 = arith.addf %217, %219 : vector<16x128xf32>
    %221 = arith.negf %220 : vector<16x128xf32>
    %222 = math.exp %221 : vector<16x128xf32>
    %cst_104 = arith.constant 1.000000e+00 : f32
    %223 = vector.broadcast %cst_104 : f32 to vector<16x128xf32>
    %224 = arith.addf %223, %222 : vector<16x128xf32>
    %225 = arith.divf %223, %224 : vector<16x128xf32>
    %226 = math.tanh %220 : vector<16x128xf32>
    %c32_i32_105 = arith.constant 32 : i32
    %227 = tpu.dynamic_rotate %225 by %c32_i32_105 dim 1 : vector<16x128xf32>, i32 -> vector<16x128xf32>
    %c16_i32_106 = arith.constant 16 : i32
    %228 = tpu.dynamic_rotate %225 by %c16_i32_106 dim 1 : vector<16x128xf32>, i32 -> vector<16x128xf32>
    %c112_i32_107 = arith.constant 112 : i32
    %229 = tpu.dynamic_rotate %225 by %c112_i32_107 dim 1 : vector<16x128xf32>, i32 -> vector<16x128xf32>
    %230 = arith.mulf %228, %205 : vector<16x128xf32>
    %231 = arith.mulf %227, %226 : vector<16x128xf32>
    %232 = arith.addf %230, %231 : vector<16x128xf32>
    %233 = math.tanh %232 : vector<16x128xf32>
    %234 = arith.mulf %229, %233 : vector<16x128xf32>
    %cst_108 = arith.constant 0.000000e+00 : f32
    %235 = vector.broadcast %cst_108 : f32 to vector<16x128xf32>
    %236 = arith.select %97, %234, %235 : vector<16x128xi1>, vector<16x128xf32>
    %c5_i32_109 = arith.constant 5 : i32
    %237 = arith.index_cast %c5_i32_109 : i32 to index
    %c0_110 = arith.constant 0 : index
    %c0_111 = arith.constant 0 : index
    %238 = vector.load %arg8[%237, %c0_110, %c0_111] : memref<8x16x128xf32, #tpu.memory_space<vmem>>, vector<1x16x128xf32>
    %239 = vector.shape_cast %238 : vector<1x16x128xf32> to vector<16x128xf32>
    %c7_i32_112 = arith.constant 7 : i32
    %240 = arith.subi %c7_i32_112, %c5_i32_109 : i32
    %241 = arith.index_cast %240 : i32 to index
    %c0_113 = arith.constant 0 : index
    %c0_114 = arith.constant 0 : index
    %242 = vector.load %arg8[%241, %c0_113, %c0_114] : memref<8x16x128xf32, #tpu.memory_space<vmem>>, vector<1x16x128xf32>
    %243 = vector.shape_cast %242 : vector<1x16x128xf32> to vector<16x128xf32>
    %244 = arith.select %99, %239, %243 : vector<16x128xi1>, vector<16x128xf32>
    %245 = arith.truncf %236 : vector<16x128xf32> to vector<16x128xbf16>
    %cst_115 = arith.constant dense<0.000000e+00> : vector<16x128xf32>
    %246 = tpu.matmul %245, %100, %cst_115 {dimension_numbers = #tpu.dot_dimension_numbers<[1], [0], [0], [1], [0, 0, 1, 1], [], []>} : vector<16x128xbf16>, vector<128x128xbf16>, vector<16x128xf32> -> vector<16x128xf32>
    %247 = arith.addf %244, %246 : vector<16x128xf32>
    %248 = arith.negf %247 : vector<16x128xf32>
    %249 = math.exp %248 : vector<16x128xf32>
    %cst_116 = arith.constant 1.000000e+00 : f32
    %250 = vector.broadcast %cst_116 : f32 to vector<16x128xf32>
    %251 = arith.addf %250, %249 : vector<16x128xf32>
    %252 = arith.divf %250, %251 : vector<16x128xf32>
    %253 = math.tanh %247 : vector<16x128xf32>
    %c32_i32_117 = arith.constant 32 : i32
    %254 = tpu.dynamic_rotate %252 by %c32_i32_117 dim 1 : vector<16x128xf32>, i32 -> vector<16x128xf32>
    %c16_i32_118 = arith.constant 16 : i32
    %255 = tpu.dynamic_rotate %252 by %c16_i32_118 dim 1 : vector<16x128xf32>, i32 -> vector<16x128xf32>
    %c112_i32_119 = arith.constant 112 : i32
    %256 = tpu.dynamic_rotate %252 by %c112_i32_119 dim 1 : vector<16x128xf32>, i32 -> vector<16x128xf32>
    %257 = arith.mulf %255, %232 : vector<16x128xf32>
    %258 = arith.mulf %254, %253 : vector<16x128xf32>
    %259 = arith.addf %257, %258 : vector<16x128xf32>
    %260 = math.tanh %259 : vector<16x128xf32>
    %261 = arith.mulf %256, %260 : vector<16x128xf32>
    %cst_120 = arith.constant 0.000000e+00 : f32
    %262 = vector.broadcast %cst_120 : f32 to vector<16x128xf32>
    %263 = arith.select %97, %261, %262 : vector<16x128xi1>, vector<16x128xf32>
    %c6_i32_121 = arith.constant 6 : i32
    %264 = arith.index_cast %c6_i32_121 : i32 to index
    %c0_122 = arith.constant 0 : index
    %c0_123 = arith.constant 0 : index
    %265 = vector.load %arg8[%264, %c0_122, %c0_123] : memref<8x16x128xf32, #tpu.memory_space<vmem>>, vector<1x16x128xf32>
    %266 = vector.shape_cast %265 : vector<1x16x128xf32> to vector<16x128xf32>
    %c7_i32_124 = arith.constant 7 : i32
    %267 = arith.subi %c7_i32_124, %c6_i32_121 : i32
    %268 = arith.index_cast %267 : i32 to index
    %c0_125 = arith.constant 0 : index
    %c0_126 = arith.constant 0 : index
    %269 = vector.load %arg8[%268, %c0_125, %c0_126] : memref<8x16x128xf32, #tpu.memory_space<vmem>>, vector<1x16x128xf32>
    %270 = vector.shape_cast %269 : vector<1x16x128xf32> to vector<16x128xf32>
    %271 = arith.select %99, %266, %270 : vector<16x128xi1>, vector<16x128xf32>
    %272 = arith.truncf %263 : vector<16x128xf32> to vector<16x128xbf16>
    %cst_127 = arith.constant dense<0.000000e+00> : vector<16x128xf32>
    %273 = tpu.matmul %272, %100, %cst_127 {dimension_numbers = #tpu.dot_dimension_numbers<[1], [0], [0], [1], [0, 0, 1, 1], [], []>} : vector<16x128xbf16>, vector<128x128xbf16>, vector<16x128xf32> -> vector<16x128xf32>
    %274 = arith.addf %271, %273 : vector<16x128xf32>
    %275 = arith.negf %274 : vector<16x128xf32>
    %276 = math.exp %275 : vector<16x128xf32>
    %cst_128 = arith.constant 1.000000e+00 : f32
    %277 = vector.broadcast %cst_128 : f32 to vector<16x128xf32>
    %278 = arith.addf %277, %276 : vector<16x128xf32>
    %279 = arith.divf %277, %278 : vector<16x128xf32>
    %280 = math.tanh %274 : vector<16x128xf32>
    %c32_i32_129 = arith.constant 32 : i32
    %281 = tpu.dynamic_rotate %279 by %c32_i32_129 dim 1 : vector<16x128xf32>, i32 -> vector<16x128xf32>
    %c16_i32_130 = arith.constant 16 : i32
    %282 = tpu.dynamic_rotate %279 by %c16_i32_130 dim 1 : vector<16x128xf32>, i32 -> vector<16x128xf32>
    %c112_i32_131 = arith.constant 112 : i32
    %283 = tpu.dynamic_rotate %279 by %c112_i32_131 dim 1 : vector<16x128xf32>, i32 -> vector<16x128xf32>
    %284 = arith.mulf %282, %259 : vector<16x128xf32>
    %285 = arith.mulf %281, %280 : vector<16x128xf32>
    %286 = arith.addf %284, %285 : vector<16x128xf32>
    %287 = math.tanh %286 : vector<16x128xf32>
    %288 = arith.mulf %283, %287 : vector<16x128xf32>
    %cst_132 = arith.constant 0.000000e+00 : f32
    %289 = vector.broadcast %cst_132 : f32 to vector<16x128xf32>
    %290 = arith.select %97, %288, %289 : vector<16x128xi1>, vector<16x128xf32>
    %c7_i32_133 = arith.constant 7 : i32
    %291 = arith.index_cast %c7_i32_133 : i32 to index
    %c0_134 = arith.constant 0 : index
    %c0_135 = arith.constant 0 : index
    %292 = vector.load %arg8[%291, %c0_134, %c0_135] : memref<8x16x128xf32, #tpu.memory_space<vmem>>, vector<1x16x128xf32>
    %293 = vector.shape_cast %292 : vector<1x16x128xf32> to vector<16x128xf32>
    %c7_i32_136 = arith.constant 7 : i32
    %294 = arith.subi %c7_i32_136, %c7_i32_133 : i32
    %295 = arith.index_cast %294 : i32 to index
    %c0_137 = arith.constant 0 : index
    %c0_138 = arith.constant 0 : index
    %296 = vector.load %arg8[%295, %c0_137, %c0_138] : memref<8x16x128xf32, #tpu.memory_space<vmem>>, vector<1x16x128xf32>
    %297 = vector.shape_cast %296 : vector<1x16x128xf32> to vector<16x128xf32>
    %298 = arith.select %99, %293, %297 : vector<16x128xi1>, vector<16x128xf32>
    %299 = arith.truncf %290 : vector<16x128xf32> to vector<16x128xbf16>
    %cst_139 = arith.constant dense<0.000000e+00> : vector<16x128xf32>
    %300 = tpu.matmul %299, %100, %cst_139 {dimension_numbers = #tpu.dot_dimension_numbers<[1], [0], [0], [1], [0, 0, 1, 1], [], []>} : vector<16x128xbf16>, vector<128x128xbf16>, vector<16x128xf32> -> vector<16x128xf32>
    %301 = arith.addf %298, %300 : vector<16x128xf32>
    %302 = arith.negf %301 : vector<16x128xf32>
    %303 = math.exp %302 : vector<16x128xf32>
    %cst_140 = arith.constant 1.000000e+00 : f32
    %304 = vector.broadcast %cst_140 : f32 to vector<16x128xf32>
    %305 = arith.addf %304, %303 : vector<16x128xf32>
    %306 = arith.divf %304, %305 : vector<16x128xf32>
    %307 = math.tanh %301 : vector<16x128xf32>
    %c32_i32_141 = arith.constant 32 : i32
    %308 = tpu.dynamic_rotate %306 by %c32_i32_141 dim 1 : vector<16x128xf32>, i32 -> vector<16x128xf32>
    %c16_i32_142 = arith.constant 16 : i32
    %309 = tpu.dynamic_rotate %306 by %c16_i32_142 dim 1 : vector<16x128xf32>, i32 -> vector<16x128xf32>
    %c112_i32_143 = arith.constant 112 : i32
    %310 = tpu.dynamic_rotate %306 by %c112_i32_143 dim 1 : vector<16x128xf32>, i32 -> vector<16x128xf32>
    %311 = arith.mulf %309, %286 : vector<16x128xf32>
    %312 = arith.mulf %308, %307 : vector<16x128xf32>
    %313 = arith.addf %311, %312 : vector<16x128xf32>
    %314 = math.tanh %313 : vector<16x128xf32>
    %315 = arith.mulf %310, %314 : vector<16x128xf32>
    %cst_144 = arith.constant 0.000000e+00 : f32
    %316 = vector.broadcast %cst_144 : f32 to vector<16x128xf32>
    %317 = arith.select %97, %315, %316 : vector<16x128xi1>, vector<16x128xf32>
    %c8_i32_145 = arith.constant 8 : i32
    %318 = arith.truncf %317 : vector<16x128xf32> to vector<16x128xbf16>
    %c0_146 = arith.constant 0 : index
    %c0_147 = arith.constant 0 : index
    %319 = vector.load %arg5[%c0_146, %c0_147] : memref<128x96xbf16, #tpu.memory_space<vmem>>, vector<128x96xbf16>
    %cst_148 = arith.constant dense<0.000000e+00> : vector<16x96xf32>
    %320 = tpu.matmul %318, %319, %cst_148 {dimension_numbers = #tpu.dot_dimension_numbers<[1], [0], [0], [1], [0, 0, 1, 1], [], []>} : vector<16x128xbf16>, vector<128x96xbf16>, vector<16x96xf32> -> vector<16x96xf32>
    %c0_149 = arith.constant 0 : index
    %c0_150 = arith.constant 0 : index
    %321 = vector.load %arg6[%c0_149, %c0_150] : memref<1x96xf32, #tpu.memory_space<vmem>>, vector<1x96xf32>
    %322 = vector.broadcast %321 : vector<1x96xf32> to vector<16x96xf32>
    %323 = arith.addf %320, %322 : vector<16x96xf32>
    %324 = vector.extract_strided_slice %323 {offsets = [0, 0], sizes = [16, 32], strides = [1, 1]} : vector<16x96xf32> to vector<16x32xf32>
    %cst_151 = arith.constant 0.176776692 : f32
    %325 = vector.broadcast %cst_151 : f32 to vector<16x32xf32>
    %326 = arith.mulf %324, %325 : vector<16x32xf32>
    %327 = arith.truncf %326 : vector<16x32xf32> to vector<16x32xbf16>
    %328 = vector.shape_cast %327 : vector<16x32xbf16> to vector<2x8x32xbf16>
    %329 = vector.extract_strided_slice %323 {offsets = [0, 32], sizes = [16, 32], strides = [1, 1]} : vector<16x96xf32> to vector<16x32xf32>
    %330 = arith.truncf %329 : vector<16x32xf32> to vector<16x32xbf16>
    %331 = vector.shape_cast %330 : vector<16x32xbf16> to vector<2x8x32xbf16>
    %332 = vector.extract_strided_slice %323 {offsets = [0, 64], sizes = [16, 32], strides = [1, 1]} : vector<16x96xf32> to vector<16x32xf32>
    %333 = arith.truncf %332 : vector<16x32xf32> to vector<16x32xbf16>
    %334 = vector.shape_cast %333 : vector<16x32xbf16> to vector<2x8x32xbf16>
    "tpu.trace_start"() <{level = 10 : i32, message = "btd,bsd->bts"}> : () -> ()
    %cst_152 = arith.constant dense<0.000000e+00> : vector<2x8x8xf32>
    %335 = tpu.matmul %328, %331, %cst_152 {dimension_numbers = #tpu.dot_dimension_numbers<[2], [2], [1], [1], [0, 0, 0, 1, 1, 1], [0], [0]>} : vector<2x8x32xbf16>, vector<2x8x32xbf16>, vector<2x8x8xf32> -> vector<2x8x8xf32>
    "tpu.trace_stop"() : () -> ()
    %cst_153 = arith.constant dense<0xFF800000> : vector<2x8xf32>
    %336 = vector.multi_reduction <maximumf>, %335, %cst_153 [2] : vector<2x8x8xf32> to vector<2x8xf32>
    %cst_154 = arith.constant 0xFF800000 : f32
    %337 = vector.broadcast %cst_154 : f32 to vector<2x8xf32>
    %338 = arith.maximumf %337, %336 : vector<2x8xf32>
    %339 = vector.shape_cast %338 : vector<2x8xf32> to vector<2x8x1xf32>
    %340 = vector.broadcast %339 : vector<2x8x1xf32> to vector<2x8x8xf32>
    %341 = arith.subf %335, %340 : vector<2x8x8xf32>
    %342 = math.exp %341 : vector<2x8x8xf32>
    %cst_155 = arith.constant dense<0.000000e+00> : vector<2x8xf32>
    %343 = vector.multi_reduction <add>, %342, %cst_155 [2] : vector<2x8x8xf32> to vector<2x8xf32>
    %344 = vector.shape_cast %343 : vector<2x8xf32> to vector<2x8x1xf32>
    %345 = vector.broadcast %344 : vector<2x8x1xf32> to vector<2x8x8xf32>
    %346 = arith.divf %342, %345 : vector<2x8x8xf32>
    %347 = arith.truncf %346 : vector<2x8x8xf32> to vector<2x8x8xbf16>
    "tpu.trace_start"() <{level = 10 : i32, message = "bts,bsd->btd"}> : () -> ()
    %cst_156 = arith.constant dense<0.000000e+00> : vector<2x8x32xf32>
    %348 = tpu.matmul %347, %334, %cst_156 {dimension_numbers = #tpu.dot_dimension_numbers<[2], [1], [1], [2], [0, 0, 0, 1, 1, 2], [0], [0]>} : vector<2x8x8xbf16>, vector<2x8x32xbf16>, vector<2x8x32xf32> -> vector<2x8x32xf32>
    "tpu.trace_stop"() : () -> ()
    %c0_157 = arith.constant 0 : index
    %c0_158 = arith.constant 0 : index
    %c0_159 = arith.constant 0 : index
    %349 = vector.load %arg7[%c0_157, %c0_158, %c0_159] : memref<2x8x32xf32, #tpu.memory_space<vmem>>, vector<2x8x32xf32>
    tpu.vector_store %arg7[%c0_157, %c0_158, %c0_159], %348 {strides = array<i32>} : memref<2x8x32xf32, #tpu.memory_space<vmem>>, vector<2x8x32xf32>,
    return
  }
  func.func @transform_0(%arg0: i32) -> (i32, i32, i32) {
    %c0_i32 = arith.constant 0 : i32
    %c0_i32_0 = arith.constant 0 : i32
    %c0_i32_1 = arith.constant 0 : i32
    return %c0_i32, %arg0, %c0_i32_0 : i32, i32, i32
  }
  func.func @transform_1(%arg0: i32) -> (i32, i32) {
    %c0_i32 = arith.constant 0 : i32
    %c0_i32_0 = arith.constant 0 : i32
    %c0_i32_1 = arith.constant 0 : i32
    return %c0_i32, %c0_i32_0 : i32, i32
  }
  func.func @transform_2(%arg0: i32) -> (i32, i32) {
    %c0_i32 = arith.constant 0 : i32
    %c0_i32_0 = arith.constant 0 : i32
    %c0_i32_1 = arith.constant 0 : i32
    return %c0_i32, %c0_i32_0 : i32, i32
  }
  func.func @transform_3(%arg0: i32) -> (i32, i32) {
    %c0_i32 = arith.constant 0 : i32
    %c0_i32_0 = arith.constant 0 : i32
    %c0_i32_1 = arith.constant 0 : i32
    return %c0_i32, %c0_i32_0 : i32, i32
  }
  func.func @transform_4(%arg0: i32) -> (i32, i32) {
    %c0_i32 = arith.constant 0 : i32
    %c0_i32_0 = arith.constant 0 : i32
    %c0_i32_1 = arith.constant 0 : i32
    return %c0_i32, %c0_i32_0 : i32, i32
  }
  func.func @transform_5(%arg0: i32) -> (i32, i32) {
    %c0_i32 = arith.constant 0 : i32
    %c0_i32_0 = arith.constant 0 : i32
    %c0_i32_1 = arith.constant 0 : i32
    return %c0_i32, %c0_i32_0 : i32, i32
  }
  func.func @transform_6(%arg0: i32) -> (i32, i32, i32) {
    %c0_i32 = arith.constant 0 : i32
    %c0_i32_0 = arith.constant 0 : i32
    %c0_i32_1 = arith.constant 0 : i32
    return %arg0, %c0_i32, %c0_i32_0 : i32, i32, i32
  }
}

</mosaic_0001>

<llo_original>
// kernel: tpu_custom_call.1
$region0: #{tpu_custom_call.1}
  #allocation0 [shape = 'u32[]', space=smem, size = 0x4, offset = 0x4, fixed_abs, tag = 'smem constant byte address 0x4 - core index']
  #allocation1 [shape = 'u32[144,128]{1,0:T(1,128)}', space=vmem, size = 0x12000, scoped, tag = 'internal scratch']
  #allocation2 [shape = 'f32[8,16,128]{2,1,0:T(8,128)}', space=vmem, size = 0x10000, scoped, tag = 'scratch operand']
  %s0 = inlined_call_operand.vmem [shape: bf16[8,16,32], index: 0, kind: input, shape index: {}]
  %s1 = inlined_call_operand.vmem [shape: bf16[32,128], index: 1, kind: input, shape index: {}]
  %s2 = inlined_call_operand.hbm [shape: bf16[128,128], index: 2, kind: input, shape index: {}]
  %s3 = inlined_call_operand.vmem [shape: f32[1,128], index: 3, kind: input, shape index: {}]
  %s4 = inlined_call_operand.vmem [shape: bf16[128,96], index: 4, kind: input, shape index: {}]
  %s5 = inlined_call_operand.vmem [shape: f32[1,96], index: 5, kind: input, shape index: {}]
  %s6 = inlined_call_operand.hbm [shape: f32[2,8,32], index: 6, kind: output, shape index: {}]
  %s7 = sld [smem:[#allocation0]]
  $region38: #{tpu_custom_call.1} parent=0
    _
  %s9 = ssub.s32 1, %s7
  %s10 = scalar_select 0, %s9, %s7
  $region1: #{tpu_custom_call.1} parent=0
    #allocation3 [shape = 'u8[32768]{0}', space=vmem, size = 0x8000, scoped, tag = 'input window, operand 2, single buffered']
    #allocation4 [shape = 's32[1]{0}', space=sflag, size = 0x4, scoped, tag = 'scoped memory for tpu_custom_call.1']
    #allocation5 [shape = 's32[1]{0}', space=sflag, size = 0x4, scoped, tag = 'scoped memory for tpu_custom_call.1']
    #allocation6 [shape = 'u8[8192]{0}', space=vmem, size = 0x2000, scoped, tag = 'output window, operand 0, single buffered']
    %11 = vsyncpa [#allocation4], 0
    %12 = vsyncpa [#allocation5], 0
    // Predicated region
    $region2: #{tpu_custom_call.1} parent=1 // pred_check
      _
    $region3: #{tpu_custom_call.1} parent=1 // pred_check_branch
      %14 = sbr.rel (0) target = $region5
    $region4: #{tpu_custom_call.1} parent=1 // pred_region
      _
    $region5: #{tpu_custom_call.1} parent=1 // pred_fallthru
      _
    // Predicated region
    $region6: #{tpu_custom_call.1} parent=1 // pred_check
      _
    $region7: #{tpu_custom_call.1} parent=1 // pred_check_branch
      %16 = sbr.rel (0) target = $region9
    $region8: #{tpu_custom_call.1} parent=1 // pred_region
      _
    $region9: #{tpu_custom_call.1} parent=1 // pred_fallthru
      _
    // Predicated region
    $region10: #{tpu_custom_call.1} parent=1 // pred_check
      _
    $region11: #{tpu_custom_call.1} parent=1 // pred_check_branch
      %18 = sbr.rel (0) target = $region13
    $region12: #{tpu_custom_call.1} parent=1 // pred_region
      %s20 = ssub.s32 1024, 1024
      %21 = vsyncadd [#allocation4], %s20
      %s22 = sshll.u32 [#allocation3], 4
      %s23 = int_to_ptr.vmem [resolvable:$true] %s22
      %28 = dma.hbm_to_vmem [thread:$0]  %s2, 1024, %s23, [#allocation4], 64, 64, 4
    $region13: #{tpu_custom_call.1} parent=1 // pred_fallthru
      _
    // Predicated region
    $region14: #{tpu_custom_call.1} parent=1 // pred_check
      _
    $region15: #{tpu_custom_call.1} parent=1 // pred_check_branch
      %30 = sbr.rel (0) target = $region17
    $region16: #{tpu_custom_call.1} parent=1 // pred_region
      _
    $region17: #{tpu_custom_call.1} parent=1 // pred_fallthru
      _
    // Predicated region
    $region18: #{tpu_custom_call.1} parent=1 // pred_check
      _
    $region19: #{tpu_custom_call.1} parent=1 // pred_check_branch
      %32 = sbr.rel (0) target = $region21
    $region20: #{tpu_custom_call.1} parent=1 // pred_region
      _
    $region21: #{tpu_custom_call.1} parent=1 // pred_fallthru
      _
    // Predicated region
    $region22: #{tpu_custom_call.1} parent=1 // pred_check
      _
    $region23: #{tpu_custom_call.1} parent=1 // pred_check_branch
      %34 = sbr.rel (0) target = $region25
    $region24: #{tpu_custom_call.1} parent=1 // pred_region
      _
    $region25: #{tpu_custom_call.1} parent=1 // pred_fallthru
      _
    // Predicated region
    $region26: #{tpu_custom_call.1} parent=1 // pred_check
      _
    $region27: #{tpu_custom_call.1} parent=1 // pred_check_branch
      %36 = sbr.rel (0) target = $region29
    $region28: #{tpu_custom_call.1} parent=1 // pred_region
      %37 = dma.done [#allocation4], 1024
    $region29: #{tpu_custom_call.1} parent=1 // pred_fallthru
      _
    %v39 = vld [vmem:[%s1] sm:$0xf]
    %v40 = vld [vmem:[%s1 + $0x4] sm:$0xf]
    %v41 = vld [vmem:[%s1 + $0x8] sm:$0xf]
    %v42 = vld [vmem:[%s1 + $0xc] sm:$0xf]
    %v43 = vld [vmem:[%s3] sm:$0x1]
    %v45 = vlaneseq
    %v46 = vshrl.u32 %v45, 7
    %v47 = vsub.s32 0, %v46
    %v48 = vrot.slane %v43, %v47
    %v50 = vld [vmem:[%s0] sm:$0xf]
    %v51 = vld [vmem:[%s0 + $0x4] sm:$0xf]
    %v54 = vunpack.c.l.b16 %v50
    %v55 = vunpack.c.l.b16 %v51
    %v56 = vpack.c.b16 %v55, %v54
    %v61 = vunpack.c.l.b16 %v39
    %v62 = vunpack.c.l.b16 %v40
    %v63 = vunpack.c.l.b16 %v41
    %v64 = vunpack.c.l.b16 %v42
    %v65 = vpack.c.b16 %v62, %v61
    %v66 = vpack.c.b16 %v64, %v63
    %vm69 = vcmask 261120
    %v71 = vsel %vm69, %v56, 0
    %73 = vmatprep.subr.bf16.mxu0 0
    %74 = vmatpush1.bf16.msra.mxu0 %v65
    %75 = vmatprep.subr.bf16.mxu0 0
    %76 = vmatpush1.bf16.msra.mxu0 %v66
    %77 = vmatprep.subr.bf16.mxu0 0
    %78 = vmatpush1.bf16.msra.mxu0 0
    %79 = vmatprep.subr.bf16.mxu0 0
    %80 = vmatpush1.bf16.msra.mxu0 0
    %81 = vmatprep.subr.bf16.mxu0 0
    %82 = vmatpush1.bf16.msra.mxu0 0
    %83 = vmatprep.subr.bf16.mxu0 0
    %84 = vmatpush1.bf16.msra.mxu0 0
    %85 = vmatprep.subr.bf16.mxu0 0
    %86 = vmatpush1.bf16.msra.mxu0 0
    %87 = vmatprep.subr.bf16.mxu0 0
    %88 = vmatpush1.bf16.msra.mxu0 0
    %89 = vmatprep.subr.bf16.mxu0 0
    %90 = vmatpush1.bf16.msra.mxu0 0
    %91 = vmatprep.subr.bf16.mxu0 0
    %92 = vmatpush1.bf16.msra.mxu0 0
    %93 = vmatprep.subr.bf16.mxu0 0
    %94 = vmatpush1.bf16.msra.mxu0 0
    %95 = vmatprep.subr.bf16.mxu0 0
    %96 = vmatpush1.bf16.msra.mxu0 0
    %97 = vmatprep.subr.bf16.mxu0 0
    %98 = vmatpush1.bf16.msra.mxu0 0
    %99 = vmatprep.subr.bf16.mxu0 0
    %100 = vmatpush1.bf16.msra.mxu0 0
    %101 = vmatprep.subr.bf16.mxu0 0
    %102 = vmatpush1.bf16.msra.mxu0 0
    %103 = vmatprep.subr.bf16.mxu0 0
    %104 = vmatpush1.bf16.msra.mxu0 0
    %105 = vmatprep.mubr.bf16.mxu0 0
    %106 = vmatmul.mubr.bf16.gmra.mrb[0].mxu0 %v71
    %v107 = vpop.f32.mrb[0].mxu0
    %v108 = vadd.f32 %v48, %v107
    %v109 = vpop.f32.mrb[0].mxu0
    %v110 = vpop.f32.mrb[0].mxu0
    %v111 = vadd.f32 %v48, %v110
    %v112 = vpop.f32.mrb[0].mxu0
    %113 = vdwg.mxu0
    %114 = vst [vmem:[#allocation2] sm:$0xff] %v108
    %115 = vst [vmem:[#allocation2 + $0x8] sm:$0xff] %v111
    %s116 = scalar_lea.vmem %s0, 8
    %v117 = vld [vmem:[%s116] sm:$0xf]
    %v118 = vld [vmem:[%s116 + $0x4] sm:$0xf]
    %v121 = vunpack.c.l.b16 %v117
    %v122 = vunpack.c.l.b16 %v118
    %v123 = vpack.c.b16 %v122, %v121
    %v125 = vsel %vm69, %v123, 0
    %127 = vmatprep.subr.bf16.mxu0 0
    %128 = vmatpush1.bf16.msra.mxu0 %v65
    %129 = vmatprep.subr.bf16.mxu0 0
    %130 = vmatpush1.bf16.msra.mxu0 %v66
    %131 = vmatprep.subr.bf16.mxu0 0
    %132 = vmatpush1.bf16.msra.mxu0 0
    %133 = vmatprep.subr.bf16.mxu0 0
    %134 = vmatpush1.bf16.msra.mxu0 0
    %135 = vmatprep.subr.bf16.mxu0 0
    %136 = vmatpush1.bf16.msra.mxu0 0
    %137 = vmatprep.subr.bf16.mxu0 0
    %138 = vmatpush1.bf16.msra.mxu0 0
    %139 = vmatprep.subr.bf16.mxu0 0
    %140 = vmatpush1.bf16.msra.mxu0 0
    %141 = vmatprep.subr.bf16.mxu0 0
    %142 = vmatpush1.bf16.msra.mxu0 0
    %143 = vmatprep.subr.bf16.mxu0 0
    %144 = vmatpush1.bf16.msra.mxu0 0
    %145 = vmatprep.subr.bf16.mxu0 0
    %146 = vmatpush1.bf16.msra.mxu0 0
    %147 = vmatprep.subr.bf16.mxu0 0
    %148 = vmatpush1.bf16.msra.mxu0 0
    %149 = vmatprep.subr.bf16.mxu0 0
    %150 = vmatpush1.bf16.msra.mxu0 0
    %151 = vmatprep.subr.bf16.mxu0 0
    %152 = vmatpush1.bf16.msra.mxu0 0
    %153 = vmatprep.subr.bf16.mxu0 0
    %154 = vmatpush1.bf16.msra.mxu0 0
    %155 = vmatprep.subr.bf16.mxu0 0
    %156 = vmatpush1.bf16.msra.mxu0 0
    %157 = vmatprep.subr.bf16.mxu0 0
    %158 = vmatpush1.bf16.msra.mxu0 0
    %159 = vmatprep.mubr.bf16.mxu0 0
    %160 = vmatmul.mubr.bf16.gmra.mrb[0].mxu0 %v125
    %v161 = vpop.f32.mrb[0].mxu0
    %v162 = vadd.f32 %v48, %v161
    %v163 = vpop.f32.mrb[0].mxu0
    %v164 = vpop.f32.mrb[0].mxu0
    %v165 = vadd.f32 %v48, %v164
    %v166 = vpop.f32.mrb[0].mxu0
    %167 = vdwg.mxu0
    %s168 = scalar_lea.vmem [#allocation2], 16
    %169 = vst [vmem:[%s168] sm:$0xff] %v162
    %170 = vst [vmem:[%s168 + $0x8] sm:$0xff] %v165
    %s171 = scalar_lea.vmem %s0, 16
    %v172 = vld [vmem:[%s171] sm:$0xf]
    %v173 = vld [vmem:[%s171 + $0x4] sm:$0xf]
    %v176 = vunpack.c.l.b16 %v172
    %v177 = vunpack.c.l.b16 %v173
    %v178 = vpack.c.b16 %v177, %v176
    %v180 = vsel %vm69, %v178, 0
    %182 = vmatprep.subr.bf16.mxu0 0
    %183 = vmatpush1.bf16.msra.mxu0 %v65
    %184 = vmatprep.subr.bf16.mxu0 0
    %185 = vmatpush1.bf16.msra.mxu0 %v66
    %186 = vmatprep.subr.bf16.mxu0 0
    %187 = vmatpush1.bf16.msra.mxu0 0
    %188 = vmatprep.subr.bf16.mxu0 0
    %189 = vmatpush1.bf16.msra.mxu0 0
    %190 = vmatprep.subr.bf16.mxu0 0
    %191 = vmatpush1.bf16.msra.mxu0 0
    %192 = vmatprep.subr.bf16.mxu0 0
    %193 = vmatpush1.bf16.msra.mxu0 0
    %194 = vmatprep.subr.bf16.mxu0 0
    %195 = vmatpush1.bf16.msra.mxu0 0
    %196 = vmatprep.subr.bf16.mxu0 0
    %197 = vmatpush1.bf16.msra.mxu0 0
    %198 = vmatprep.subr.bf16.mxu0 0
    %199 = vmatpush1.bf16.msra.mxu0 0
    %200 = vmatprep.subr.bf16.mxu0 0
    %201 = vmatpush1.bf16.msra.mxu0 0
    %202 = vmatprep.subr.bf16.mxu0 0
    %203 = vmatpush1.bf16.msra.mxu0 0
    %204 = vmatprep.subr.bf16.mxu0 0
    %205 = vmatpush1.bf16.msra.mxu0 0
    %206 = vmatprep.subr.bf16.mxu0 0
    %207 = vmatpush1.bf16.msra.mxu0 0
    %208 = vmatprep.subr.bf16.mxu0 0
    %209 = vmatpush1.bf16.msra.mxu0 0
    %210 = vmatprep.subr.bf16.mxu0 0
    %211 = vmatpush1.bf16.msra.mxu0 0
    %212 = vmatprep.subr.bf16.mxu0 0
    %213 = vmatpush1.bf16.msra.mxu0 0
    %214 = vmatprep.mubr.bf16.mxu0 0
    %215 = vmatmul.mubr.bf16.gmra.mrb[0].mxu0 %v180
    %v216 = vpop.f32.mrb[0].mxu0
    %v217 = vadd.f32 %v48, %v216
    %v218 = vpop.f32.mrb[0].mxu0
    %v219 = vpop.f32.mrb[0].mxu0
    %v220 = vadd.f32 %v48, %v219
    %v221 = vpop.f32.mrb[0].mxu0
    %222 = vdwg.mxu0
    %s223 = scalar_lea.vmem [#allocation2], 32
    %224 = vst [vmem:[%s223] sm:$0xff] %v217
    %225 = vst [vmem:[%s223 + $0x8] sm:$0xff] %v220
    %s226 = scalar_lea.vmem %s0, 24
    %v227 = vld [vmem:[%s226] sm:$0xf]
    %v228 = vld [vmem:[%s226 + $0x4] sm:$0xf]
    %v231 = vunpack.c.l.b16 %v227
    %v232 = vunpack.c.l.b16 %v228
    %v233 = vpack.c.b16 %v232, %v231
    %v235 = vsel %vm69, %v233, 0
    %237 = vmatprep.subr.bf16.mxu0 0
    %238 = vmatpush1.bf16.msra.mxu0 %v65
    %239 = vmatprep.subr.bf16.mxu0 0
    %240 = vmatpush1.bf16.msra.mxu0 %v66
    %241 = vmatprep.subr.bf16.mxu0 0
    %242 = vmatpush1.bf16.msra.mxu0 0
    %243 = vmatprep.subr.bf16.mxu0 0
    %244 = vmatpush1.bf16.msra.mxu0 0
    %245 = vmatprep.subr.bf16.mxu0 0
    %246 = vmatpush1.bf16.msra.mxu0 0
    %247 = vmatprep.subr.bf16.mxu0 0
    %248 = vmatpush1.bf16.msra.mxu0 0
    %249 = vmatprep.subr.bf16.mxu0 0
    %250 = vmatpush1.bf16.msra.mxu0 0
    %251 = vmatprep.subr.bf16.mxu0 0
    %252 = vmatpush1.bf16.msra.mxu0 0
    %253 = vmatprep.subr.bf16.mxu0 0
    %254 = vmatpush1.bf16.msra.mxu0 0
    %255 = vmatprep.subr.bf16.mxu0 0
    %256 = vmatpush1.bf16.msra.mxu0 0
    %257 = vmatprep.subr.bf16.mxu0 0
    %258 = vmatpush1.bf16.msra.mxu0 0
    %259 = vmatprep.subr.bf16.mxu0 0
    %260 = vmatpush1.bf16.msra.mxu0 0
    %261 = vmatprep.subr.bf16.mxu0 0
    %262 = vmatpush1.bf16.msra.mxu0 0
    %263 = vmatprep.subr.bf16.mxu0 0
    %264 = vmatpush1.bf16.msra.mxu0 0
    %265 = vmatprep.subr.bf16.mxu0 0
    %266 = vmatpush1.bf16.msra.mxu0 0
    %267 = vmatprep.subr.bf16.mxu0 0
    %268 = vmatpush1.bf16.msra.mxu0 0
    %269 = vmatprep.mubr.bf16.mxu0 0
    %270 = vmatmul.mubr.bf16.gmra.mrb[0].mxu0 %v235
    %v271 = vpop.f32.mrb[0].mxu0
    %v272 = vadd.f32 %v48, %v271
    %v273 = vpop.f32.mrb[0].mxu0
    %v274 = vpop.f32.mrb[0].mxu0
    %v275 = vadd.f32 %v48, %v274
    %v276 = vpop.f32.mrb[0].mxu0
    %277 = vdwg.mxu0
    %s278 = scalar_lea.vmem [#allocation2], 48
    %279 = vst [vmem:[%s278] sm:$0xff] %v272
    %280 = vst [vmem:[%s278 + $0x8] sm:$0xff] %v275
    %s281 = scalar_lea.vmem %s0, 32
    %v282 = vld [vmem:[%s281] sm:$0xf]
    %v283 = vld [vmem:[%s281 + $0x4] sm:$0xf]
    %v286 = vunpack.c.l.b16 %v282
    %v287 = vunpack.c.l.b16 %v283
    %v288 = vpack.c.b16 %v287, %v286
    %v290 = vsel %vm69, %v288, 0
    %292 = vmatprep.subr.bf16.mxu0 0
    %293 = vmatpush1.bf16.msra.mxu0 %v65
    %294 = vmatprep.subr.bf16.mxu0 0
    %295 = vmatpush1.bf16.msra.mxu0 %v66
    %296 = vmatprep.subr.bf16.mxu0 0
    %297 = vmatpush1.bf16.msra.mxu0 0
    %298 = vmatprep.subr.bf16.mxu0 0
    %299 = vmatpush1.bf16.msra.mxu0 0
    %300 = vmatprep.subr.bf16.mxu0 0
    %301 = vmatpush1.bf16.msra.mxu0 0
    %302 = vmatprep.subr.bf16.mxu0 0
    %303 = vmatpush1.bf16.msra.mxu0 0
    %304 = vmatprep.subr.bf16.mxu0 0
    %305 = vmatpush1.bf16.msra.mxu0 0
    %306 = vmatprep.subr.bf16.mxu0 0
    %307 = vmatpush1.bf16.msra.mxu0 0
    %308 = vmatprep.subr.bf16.mxu0 0
    %309 = vmatpush1.bf16.msra.mxu0 0
    %310 = vmatprep.subr.bf16.mxu0 0
    %311 = vmatpush1.bf16.msra.mxu0 0
    %312 = vmatprep.subr.bf16.mxu0 0
    %313 = vmatpush1.bf16.msra.mxu0 0
    %314 = vmatprep.subr.bf16.mxu0 0
    %315 = vmatpush1.bf16.msra.mxu0 0
    %316 = vmatprep.subr.bf16.mxu0 0
    %317 = vmatpush1.bf16.msra.mxu0 0
    %318 = vmatprep.subr.bf16.mxu0 0
    %319 = vmatpush1.bf16.msra.mxu0 0
    %320 = vmatprep.subr.bf16.mxu0 0
    %321 = vmatpush1.bf16.msra.mxu0 0
    %322 = vmatprep.subr.bf16.mxu0 0
    %323 = vmatpush1.bf16.msra.mxu0 0
    %324 = vmatprep.mubr.bf16.mxu0 0
    %325 = vmatmul.mubr.bf16.gmra.mrb[0].mxu0 %v290
    %v326 = vpop.f32.mrb[0].mxu0
    %v327 = vadd.f32 %v48, %v326
    %v328 = vpop.f32.mrb[0].mxu0
    %v329 = vpop.f32.mrb[0].mxu0
    %v330 = vadd.f32 %v48, %v329
    %v331 = vpop.f32.mrb[0].mxu0
    %332 = vdwg.mxu0
    %s333 = scalar_lea.vmem [#allocation2], 64
    %334 = vst [vmem:[%s333] sm:$0xff] %v327
    %335 = vst [vmem:[%s333 + $0x8] sm:$0xff] %v330
    %s336 = scalar_lea.vmem %s0, 40
    %v337 = vld [vmem:[%s336] sm:$0xf]
    %v338 = vld [vmem:[%s336 + $0x4] sm:$0xf]
    %v341 = vunpack.c.l.b16 %v337
    %v342 = vunpack.c.l.b16 %v338
    %v343 = vpack.c.b16 %v342, %v341
    %v345 = vsel %vm69, %v343, 0
    %347 = vmatprep.subr.bf16.mxu0 0
    %348 = vmatpush1.bf16.msra.mxu0 %v65
    %349 = vmatprep.subr.bf16.mxu0 0
    %350 = vmatpush1.bf16.msra.mxu0 %v66
    %351 = vmatprep.subr.bf16.mxu0 0
    %352 = vmatpush1.bf16.msra.mxu0 0
    %353 = vmatprep.subr.bf16.mxu0 0
    %354 = vmatpush1.bf16.msra.mxu0 0
    %355 = vmatprep.subr.bf16.mxu0 0
    %356 = vmatpush1.bf16.msra.mxu0 0
    %357 = vmatprep.subr.bf16.mxu0 0
    %358 = vmatpush1.bf16.msra.mxu0 0
    %359 = vmatprep.subr.bf16.mxu0 0
    %360 = vmatpush1.bf16.msra.mxu0 0
    %361 = vmatprep.subr.bf16.mxu0 0
    %362 = vmatpush1.bf16.msra.mxu0 0
    %363 = vmatprep.subr.bf16.mxu0 0
    %364 = vmatpush1.bf16.msra.mxu0 0
    %365 = vmatprep.subr.bf16.mxu0 0
    %366 = vmatpush1.bf16.msra.mxu0 0
    %367 = vmatprep.subr.bf16.mxu0 0
    %368 = vmatpush1.bf16.msra.mxu0 0
    %369 = vmatprep.subr.bf16.mxu0 0
    %370 = vmatpush1.bf16.msra.mxu0 0
    %371 = vmatprep.subr.bf16.mxu0 0
    %372 = vmatpush1.bf16.msra.mxu0 0
    %373 = vmatprep.subr.bf16.mxu0 0
    %374 = vmatpush1.bf16.msra.mxu0 0
    %375 = vmatprep.subr.bf16.mxu0 0
    %376 = vmatpush1.bf16.msra.mxu0 0
    %377 = vmatprep.subr.bf16.mxu0 0
    %378 = vmatpush1.bf16.msra.mxu0 0
    %379 = vmatprep.mubr.bf16.mxu0 0
    %380 = vmatmul.mubr.bf16.gmra.mrb[0].mxu0 %v345
    %v381 = vpop.f32.mrb[0].mxu0
    %v382 = vadd.f32 %v48, %v381
    %v383 = vpop.f32.mrb[0].mxu0
    %v384 = vpop.f32.mrb[0].mxu0
    %v385 = vadd.f32 %v48, %v384
    %v386 = vpop.f32.mrb[0].mxu0
    %387 = vdwg.mxu0
    %s388 = scalar_lea.vmem [#allocation2], 80
    %389 = vst [vmem:[%s388] sm:$0xff] %v382
    %390 = vst [vmem:[%s388 + $0x8] sm:$0xff] %v385
    %s391 = scalar_lea.vmem %s0, 48
    %v392 = vld [vmem:[%s391] sm:$0xf]
    %v393 = vld [vmem:[%s391 + $0x4] sm:$0xf]
    %v396 = vunpack.c.l.b16 %v392
    %v397 = vunpack.c.l.b16 %v393
    %v398 = vpack.c.b16 %v397, %v396
    %v400 = vsel %vm69, %v398, 0
    %402 = vmatprep.subr.bf16.mxu0 0
    %403 = vmatpush1.bf16.msra.mxu0 %v65
    %404 = vmatprep.subr.bf16.mxu0 0
    %405 = vmatpush1.bf16.msra.mxu0 %v66
    %406 = vmatprep.subr.bf16.mxu0 0
    %407 = vmatpush1.bf16.msra.mxu0 0
    %408 = vmatprep.subr.bf16.mxu0 0
    %409 = vmatpush1.bf16.msra.mxu0 0
    %410 = vmatprep.subr.bf16.mxu0 0
    %411 = vmatpush1.bf16.msra.mxu0 0
    %412 = vmatprep.subr.bf16.mxu0 0
    %413 = vmatpush1.bf16.msra.mxu0 0
    %414 = vmatprep.subr.bf16.mxu0 0
    %415 = vmatpush1.bf16.msra.mxu0 0
    %416 = vmatprep.subr.bf16.mxu0 0
    %417 = vmatpush1.bf16.msra.mxu0 0
    %418 = vmatprep.subr.bf16.mxu0 0
    %419 = vmatpush1.bf16.msra.mxu0 0
    %420 = vmatprep.subr.bf16.mxu0 0
    %421 = vmatpush1.bf16.msra.mxu0 0
    %422 = vmatprep.subr.bf16.mxu0 0
    %423 = vmatpush1.bf16.msra.mxu0 0
    %424 = vmatprep.subr.bf16.mxu0 0
    %425 = vmatpush1.bf16.msra.mxu0 0
    %426 = vmatprep.subr.bf16.mxu0 0
    %427 = vmatpush1.bf16.msra.mxu0 0
    %428 = vmatprep.subr.bf16.mxu0 0
    %429 = vmatpush1.bf16.msra.mxu0 0
    %430 = vmatprep.subr.bf16.mxu0 0
    %431 = vmatpush1.bf16.msra.mxu0 0
    %432 = vmatprep.subr.bf16.mxu0 0
    %433 = vmatpush1.bf16.msra.mxu0 0
    %434 = vmatprep.mubr.bf16.mxu0 0
    %435 = vmatmul.mubr.bf16.gmra.mrb[0].mxu0 %v400
    %v436 = vpop.f32.mrb[0].mxu0
    %v437 = vadd.f32 %v48, %v436
    %v438 = vpop.f32.mrb[0].mxu0
    %v439 = vpop.f32.mrb[0].mxu0
    %v440 = vadd.f32 %v48, %v439
    %v441 = vpop.f32.mrb[0].mxu0
    %442 = vdwg.mxu0
    %s443 = scalar_lea.vmem [#allocation2], 96
    %444 = vst [vmem:[%s443] sm:$0xff] %v437
    %445 = vst [vmem:[%s443 + $0x8] sm:$0xff] %v440
    %s446 = scalar_lea.vmem %s0, 56
    %v447 = vld [vmem:[%s446] sm:$0xf]
    %v448 = vld [vmem:[%s446 + $0x4] sm:$0xf]
    %v451 = vunpack.c.l.b16 %v447
    %v452 = vunpack.c.l.b16 %v448
    %v453 = vpack.c.b16 %v452, %v451
    %v455 = vsel %vm69, %v453, 0
    %457 = vmatprep.subr.bf16.mxu0 0
    %458 = vmatpush1.bf16.msra.mxu0 %v65
    %459 = vmatprep.subr.bf16.mxu0 0
    %460 = vmatpush1.bf16.msra.mxu0 %v66
    %461 = vmatprep.subr.bf16.mxu0 0
    %462 = vmatpush1.bf16.msra.mxu0 0
    %463 = vmatprep.subr.bf16.mxu0 0
    %464 = vmatpush1.bf16.msra.mxu0 0
    %465 = vmatprep.subr.bf16.mxu0 0
    %466 = vmatpush1.bf16.msra.mxu0 0
    %467 = vmatprep.subr.bf16.mxu0 0
    %468 = vmatpush1.bf16.msra.mxu0 0
    %469 = vmatprep.subr.bf16.mxu0 0
    %470 = vmatpush1.bf16.msra.mxu0 0
    %471 = vmatprep.subr.bf16.mxu0 0
    %472 = vmatpush1.bf16.msra.mxu0 0
    %473 = vmatprep.subr.bf16.mxu0 0
    %474 = vmatpush1.bf16.msra.mxu0 0
    %475 = vmatprep.subr.bf16.mxu0 0
    %476 = vmatpush1.bf16.msra.mxu0 0
    %477 = vmatprep.subr.bf16.mxu0 0
    %478 = vmatpush1.bf16.msra.mxu0 0
    %479 = vmatprep.subr.bf16.mxu0 0
    %480 = vmatpush1.bf16.msra.mxu0 0
    %481 = vmatprep.subr.bf16.mxu0 0
    %482 = vmatpush1.bf16.msra.mxu0 0
    %483 = vmatprep.subr.bf16.mxu0 0
    %484 = vmatpush1.bf16.msra.mxu0 0
    %485 = vmatprep.subr.bf16.mxu0 0
    %486 = vmatpush1.bf16.msra.mxu0 0
    %487 = vmatprep.subr.bf16.mxu0 0
    %488 = vmatpush1.bf16.msra.mxu0 0
    %489 = vmatprep.mubr.bf16.mxu0 0
    %490 = vmatmul.mubr.bf16.gmra.mrb[0].mxu0 %v455
    %v491 = vpop.f32.mrb[0].mxu0
    %v492 = vadd.f32 %v48, %v491
    %v493 = vpop.f32.mrb[0].mxu0
    %v494 = vpop.f32.mrb[0].mxu0
    %v495 = vadd.f32 %v48, %v494
    %v496 = vpop.f32.mrb[0].mxu0
    %497 = vdwg.mxu0
    %s498 = scalar_lea.vmem [#allocation2], 112
    %499 = vst [vmem:[%s498] sm:$0xff] %v492
    %500 = vst [vmem:[%s498 + $0x8] sm:$0xff] %v495
    %v501 = vlaneseq
    %v502 = vand.u32 %v501, 127
    %vm503 = vcmp.lt.s32.totalorder %v502, 0
    %v504 = vsub.s32 0, %v502
    %v505 = vsel %vm503, %v504, %v502
    %v506 = vshrl.u32 %v505, 6
    %v507 = vand.u32 %v505, 63
    %v508 = vsub.s32 0, %v507
    %v509 = vsel %vm503, %v508, %v507
    %vm510 = vcmp.ne.s32.totalorder %v509, 0
    %vm511 = vcmp.lt.s32.totalorder %v509, 0
    %vm512 = vmand %vm511, %vm510
    %v513 = vadd.s32 %v509, 64
    %v514 = vsel %vm512, %v513, %v509
    %vm515 = vcmp.ge.s32.totalorder %v514, 32
    %vm516 = vcmp.lt.s32.totalorder %v514, 48
    %vm517 = vmand %vm515, %vm516
    %vm518 = vcmp.lt.s32.totalorder %v502, 64
    %v519 = vld [vmem:[#allocation3] sm:$0xf]
    %v520 = vld [vmem:[#allocation3 + $0x4] sm:$0xf]
    %v521 = vld [vmem:[#allocation3 + $0x8] sm:$0xf]
    %v522 = vld [vmem:[#allocation3 + $0xc] sm:$0xf]
    %v523 = vld [vmem:[#allocation3 + $0x10] sm:$0xf]
    %v524 = vld [vmem:[#allocation3 + $0x14] sm:$0xf]
    %v525 = vld [vmem:[#allocation3 + $0x18] sm:$0xf]
    %v526 = vld [vmem:[#allocation3 + $0x1c] sm:$0xf]
    %v527 = vld [vmem:[#allocation3 + $0x20] sm:$0xf]
    %v528 = vld [vmem:[#allocation3 + $0x24] sm:$0xf]
    %v529 = vld [vmem:[#allocation3 + $0x28] sm:$0xf]
    %v530 = vld [vmem:[#allocation3 + $0x2c] sm:$0xf]
    %v531 = vld [vmem:[#allocation3 + $0x30] sm:$0xf]
    %v532 = vld [vmem:[#allocation3 + $0x34] sm:$0xf]
    %v533 = vld [vmem:[#allocation3 + $0x38] sm:$0xf]
    %v534 = vld [vmem:[#allocation3 + $0x3c] sm:$0xf]
    %v535 = vld [vmem:[#allocation2] sm:$0xff]
    %v536 = vld [vmem:[#allocation2 + $0x8] sm:$0xff]
    %v537 = vld [vmem:[%s498] sm:$0xff]
    %v538 = vld [vmem:[%s498 + $0x8] sm:$0xff]
    %v539 = vsel %vm518, %v535, %v537
    %v540 = vsel %vm518, %v536, %v538
    %v557 = vunpack.c.l.b16 %v519
    %v558 = vunpack.c.l.b16 %v520
    %v559 = vunpack.c.l.b16 %v521
    %v560 = vunpack.c.l.b16 %v522
    %v561 = vunpack.c.l.b16 %v523
    %v562 = vunpack.c.l.b16 %v524
    %v563 = vunpack.c.l.b16 %v525
    %v564 = vunpack.c.l.b16 %v526
    %v565 = vunpack.c.l.b16 %v527
    %v566 = vunpack.c.l.b16 %v528
    %v567 = vunpack.c.l.b16 %v529
    %v568 = vunpack.c.l.b16 %v530
    %v569 = vunpack.c.l.b16 %v531
    %v570 = vunpack.c.l.b16 %v532
    %v571 = vunpack.c.l.b16 %v533
    %v572 = vunpack.c.l.b16 %v534
    %v573 = vpack.c.b16 %v558, %v557
    %v574 = vpack.c.b16 %v560, %v559
    %v575 = vpack.c.b16 %v562, %v561
    %v576 = vpack.c.b16 %v564, %v563
    %v577 = vpack.c.b16 %v566, %v565
    %v578 = vpack.c.b16 %v568, %v567
    %v579 = vpack.c.b16 %v570, %v569
    %v580 = vpack.c.b16 %v572, %v571
    %589 = vmatprep.subr.bf16.mxu0 0
    %590 = vmatpush1.bf16.msra.mxu0 %v573
    %591 = vmatprep.subr.bf16.mxu0 0
    %592 = vmatpush1.bf16.msra.mxu0 %v574
    %593 = vmatprep.subr.bf16.mxu0 0
    %594 = vmatpush1.bf16.msra.mxu0 %v575
    %595 = vmatprep.subr.bf16.mxu0 0
    %596 = vmatpush1.bf16.msra.mxu0 %v576
    %597 = vmatprep.subr.bf16.mxu0 0
    %598 = vmatpush1.bf16.msra.mxu0 %v577
    %599 = vmatprep.subr.bf16.mxu0 0
    %600 = vmatpush1.bf16.msra.mxu0 %v578
    %601 = vmatprep.subr.bf16.mxu0 0
    %602 = vmatpush1.bf16.msra.mxu0 %v579
    %603 = vmatprep.subr.bf16.mxu0 0
    %604 = vmatpush1.bf16.msra.mxu0 %v580
    %605 = vmatprep.subr.bf16.mxu0 0
    %606 = vmatpush1.bf16.msra.mxu0 0
    %607 = vmatprep.subr.bf16.mxu0 0
    %608 = vmatpush1.bf16.msra.mxu0 0
    %609 = vmatprep.subr.bf16.mxu0 0
    %610 = vmatpush1.bf16.msra.mxu0 0
    %611 = vmatprep.subr.bf16.mxu0 0
    %612 = vmatpush1.bf16.msra.mxu0 0
    %613 = vmatprep.subr.bf16.mxu0 0
    %614 = vmatpush1.bf16.msra.mxu0 0
    %615 = vmatprep.subr.bf16.mxu0 0
    %616 = vmatpush1.bf16.msra.mxu0 0
    %617 = vmatprep.subr.bf16.mxu0 0
    %618 = vmatpush1.bf16.msra.mxu0 0
    %619 = vmatprep.subr.bf16.mxu0 0
    %620 = vmatpush1.bf16.msra.mxu0 0
    %621 = vmatprep.mubr.bf16.mxu0 0
    %622 = vmatmul.mubr.bf16.gmra.mrb[0].mxu0 0
    %v623 = vpop.f32.mrb[0].mxu0
    %v624 = vadd.f32 0.0, %v623
    %v625 = vpop.f32.mrb[0].mxu0
    %v626 = vpop.f32.mrb[0].mxu0
    %v627 = vadd.f32 0.0, %v626
    %v628 = vpop.f32.mrb[0].mxu0
    %629 = vdwg.mxu0
    %v630 = vadd.f32 %v539, %v624
    %v631 = vadd.f32 %v540, %v627
    %v632 = vxor.u32 %v630, 2147483648
    %v633 = vxor.u32 %v631, 2147483648
    %v634 = vmul.f32 %v632, 1.442695
    %v635 = vpow.pop %v634
    %v636 = vmul.f32 %v633, 1.442695
    %v637 = vpow.pop %v636
    %v638 = vadd.f32 %v635, 1.0
    %v639 = vadd.f32 %v637, 1.0
    %v640 = vrcp.pop %v638
    %v641 = vmul.f32 1.0, %v640
    %v642 = vrcp.pop %v639
    %v643 = vmul.f32 1.0, %v642
    %v644 = vtanh.pop %v630
    %v645 = vtanh.pop %v631
    %646 = vrot.lane.b32.xlu0 %v641, 32
    %v647 = vpop.permute.xlu0 %646
    %648 = vrot.lane.b32.xlu0 %v643, 32
    %v649 = vpop.permute.xlu0 %648
    %650 = vrot.lane.b32.xlu0 %v641, 16
    %v651 = vpop.permute.xlu0 %650
    %652 = vrot.lane.b32.xlu0 %v643, 16
    %v653 = vpop.permute.xlu0 %652
    %654 = vrot.lane.b32.xlu0 %v641, 112
    %v655 = vpop.permute.xlu0 %654
    %656 = vrot.lane.b32.xlu0 %v643, 112
    %v657 = vpop.permute.xlu0 %656
    %v658 = vmul.f32 %v651, 0.0
    %v659 = vmul.f32 %v653, 0.0
    %v660 = vmul.f32 %v647, %v644
    %v661 = vmul.f32 %v649, %v645
    %v662 = vadd.f32 %v658, %v660
    %v663 = vadd.f32 %v659, %v661
    %v664 = vtanh.pop %v662
    %v665 = vtanh.pop %v663
    %v666 = vmul.f32 %v655, %v664
    %v667 = vmul.f32 %v657, %v665
    %v668 = vsel %vm517, %v666, 0.0
    %v669 = vsel %vm517, %v667, 0.0
    %v670 = vld [vmem:[%s168] sm:$0xff]
    %v671 = vld [vmem:[%s168 + $0x8] sm:$0xff]
    %v672 = vld [vmem:[%s443] sm:$0xff]
    %v673 = vld [vmem:[%s443 + $0x8] sm:$0xff]
    %v674 = vsel %vm518, %v670, %v672
    %v675 = vsel %vm518, %v671, %v673
    %v676 = vpack.c.bf16 %v669, %v668
    %677 = vmatprep.subr.bf16.mxu0 0
    %678 = vmatpush1.bf16.msra.mxu0 %v573
    %679 = vmatprep.subr.bf16.mxu0 0
    %680 = vmatpush1.bf16.msra.mxu0 %v574
    %681 = vmatprep.subr.bf16.mxu0 0
    %682 = vmatpush1.bf16.msra.mxu0 %v575
    %683 = vmatprep.subr.bf16.mxu0 0
    %684 = vmatpush1.bf16.msra.mxu0 %v576
    %685 = vmatprep.subr.bf16.mxu0 0
    %686 = vmatpush1.bf16.msra.mxu0 %v577
    %687 = vmatprep.subr.bf16.mxu0 0
    %688 = vmatpush1.bf16.msra.mxu0 %v578
    %689 = vmatprep.subr.bf16.mxu0 0
    %690 = vmatpush1.bf16.msra.mxu0 %v579
    %691 = vmatprep.subr.bf16.mxu0 0
    %692 = vmatpush1.bf16.msra.mxu0 %v580
    %693 = vmatprep.subr.bf16.mxu0 0
    %694 = vmatpush1.bf16.msra.mxu0 0
    %695 = vmatprep.subr.bf16.mxu0 0
    %696 = vmatpush1.bf16.msra.mxu0 0
    %697 = vmatprep.subr.bf16.mxu0 0
    %698 = vmatpush1.bf16.msra.mxu0 0
    %699 = vmatprep.subr.bf16.mxu0 0
    %700 = vmatpush1.bf16.msra.mxu0 0
    %701 = vmatprep.subr.bf16.mxu0 0
    %702 = vmatpush1.bf16.msra.mxu0 0
    %703 = vmatprep.subr.bf16.mxu0 0
    %704 = vmatpush1.bf16.msra.mxu0 0
    %705 = vmatprep.subr.bf16.mxu0 0
    %706 = vmatpush1.bf16.msra.mxu0 0
    %707 = vmatprep.subr.bf16.mxu0 0
    %708 = vmatpush1.bf16.msra.mxu0 0
    %709 = vmatprep.mubr.bf16.mxu0 0
    %710 = vmatmul.mubr.bf16.gmra.mrb[0].mxu0 %v676
    %v711 = vpop.f32.mrb[0].mxu0
    %v712 = vadd.f32 0.0, %v711
    %v713 = vpop.f32.mrb[0].mxu0
    %v714 = vpop.f32.mrb[0].mxu0
    %v715 = vadd.f32 0.0, %v714
    %v716 = vpop.f32.mrb[0].mxu0
    %717 = vdwg.mxu0
    %v718 = vadd.f32 %v674, %v712
    %v719 = vadd.f32 %v675, %v715
    %v720 = vxor.u32 %v718, 2147483648
    %v721 = vxor.u32 %v719, 2147483648
    %v722 = vmul.f32 %v720, 1.442695
    %v723 = vpow.pop %v722
    %v724 = vmul.f32 %v721, 1.442695
    %v725 = vpow.pop %v724
    %v726 = vadd.f32 %v723, 1.0
    %v727 = vadd.f32 %v725, 1.0
    %v728 = vrcp.pop %v726
    %v729 = vmul.f32 1.0, %v728
    %v730 = vrcp.pop %v727
    %v731 = vmul.f32 1.0, %v730
    %v732 = vtanh.pop %v718
    %v733 = vtanh.pop %v719
    %734 = vrot.lane.b32.xlu0 %v729, 32
    %v735 = vpop.permute.xlu0 %734
    %736 = vrot.lane.b32.xlu0 %v731, 32
    %v737 = vpop.permute.xlu0 %736
    %738 = vrot.lane.b32.xlu0 %v729, 16
    %v739 = vpop.permute.xlu0 %738
    %740 = vrot.lane.b32.xlu0 %v731, 16
    %v741 = vpop.permute.xlu0 %740
    %742 = vrot.lane.b32.xlu0 %v729, 112
    %v743 = vpop.permute.xlu0 %742
    %744 = vrot.lane.b32.xlu0 %v731, 112
    %v745 = vpop.permute.xlu0 %744
    %v746 = vmul.f32 %v739, %v662
    %v747 = vmul.f32 %v741, %v663
    %v748 = vmul.f32 %v735, %v732
    %v749 = vmul.f32 %v737, %v733
    %v750 = vadd.f32 %v746, %v748
    %v751 = vadd.f32 %v747, %v749
    %v752 = vtanh.pop %v750
    %v753 = vtanh.pop %v751
    %v754 = vmul.f32 %v743, %v752
    %v755 = vmul.f32 %v745, %v753
    %v756 = vsel %vm517, %v754, 0.0
    %v757 = vsel %vm517, %v755, 0.0
    %v758 = vld [vmem:[%s223] sm:$0xff]
    %v759 = vld [vmem:[%s223 + $0x8] sm:$0xff]
    %v760 = vld [vmem:[%s388] sm:$0xff]
    %v761 = vld [vmem:[%s388 + $0x8] sm:$0xff]
    %v762 = vsel %vm518, %v758, %v760
    %v763 = vsel %vm518, %v759, %v761
    %v764 = vpack.c.bf16 %v757, %v756
    %765 = vmatprep.subr.bf16.mxu0 0
    %766 = vmatpush1.bf16.msra.mxu0 %v573
    %767 = vmatprep.subr.bf16.mxu0 0
    %768 = vmatpush1.bf16.msra.mxu0 %v574
    %769 = vmatprep.subr.bf16.mxu0 0
    %770 = vmatpush1.bf16.msra.mxu0 %v575
    %771 = vmatprep.subr.bf16.mxu0 0
    %772 = vmatpush1.bf16.msra.mxu0 %v576
    %773 = vmatprep.subr.bf16.mxu0 0
    %774 = vmatpush1.bf16.msra.mxu0 %v577
    %775 = vmatprep.subr.bf16.mxu0 0
    %776 = vmatpush1.bf16.msra.mxu0 %v578
    %777 = vmatprep.subr.bf16.mxu0 0
    %778 = vmatpush1.bf16.msra.mxu0 %v579
    %779 = vmatprep.subr.bf16.mxu0 0
    %780 = vmatpush1.bf16.msra.mxu0 %v580
    %781 = vmatprep.subr.bf16.mxu0 0
    %782 = vmatpush1.bf16.msra.mxu0 0
    %783 = vmatprep.subr.bf16.mxu0 0
    %784 = vmatpush1.bf16.msra.mxu0 0
    %785 = vmatprep.subr.bf16.mxu0 0
    %786 = vmatpush1.bf16.msra.mxu0 0
    %787 = vmatprep.subr.bf16.mxu0 0
    %788 = vmatpush1.bf16.msra.mxu0 0
    %789 = vmatprep.subr.bf16.mxu0 0
    %790 = vmatpush1.bf16.msra.mxu0 0
    %791 = vmatprep.subr.bf16.mxu0 0
    %792 = vmatpush1.bf16.msra.mxu0 0
    %793 = vmatprep.subr.bf16.mxu0 0
    %794 = vmatpush1.bf16.msra.mxu0 0
    %795 = vmatprep.subr.bf16.mxu0 0
    %796 = vmatpush1.bf16.msra.mxu0 0
    %797 = vmatprep.mubr.bf16.mxu0 0
    %798 = vmatmul.mubr.bf16.gmra.mrb[0].mxu0 %v764
    %v799 = vpop.f32.mrb[0].mxu0
    %v800 = vadd.f32 0.0, %v799
    %v801 = vpop.f32.mrb[0].mxu0
    %v802 = vpop.f32.mrb[0].mxu0
    %v803 = vadd.f32 0.0, %v802
    %v804 = vpop.f32.mrb[0].mxu0
    %805 = vdwg.mxu0
    %v806 = vadd.f32 %v762, %v800
    %v807 = vadd.f32 %v763, %v803
    %v808 = vxor.u32 %v806, 2147483648
    %v809 = vxor.u32 %v807, 2147483648
    %v810 = vmul.f32 %v808, 1.442695
    %v811 = vpow.pop %v810
    %v812 = vmul.f32 %v809, 1.442695
    %v813 = vpow.pop %v812
    %v814 = vadd.f32 %v811, 1.0
    %v815 = vadd.f32 %v813, 1.0
    %v816 = vrcp.pop %v814
    %v817 = vmul.f32 1.0, %v816
    %v818 = vrcp.pop %v815
    %v819 = vmul.f32 1.0, %v818
    %v820 = vtanh.pop %v806
    %v821 = vtanh.pop %v807
    %822 = vrot.lane.b32.xlu0 %v817, 32
    %v823 = vpop.permute.xlu0 %822
    %824 = vrot.lane.b32.xlu0 %v819, 32
    %v825 = vpop.permute.xlu0 %824
    %826 = vrot.lane.b32.xlu0 %v817, 16
    %v827 = vpop.permute.xlu0 %826
    %828 = vrot.lane.b32.xlu0 %v819, 16
    %v829 = vpop.permute.xlu0 %828
    %830 = vrot.lane.b32.xlu0 %v817, 112
    %v831 = vpop.permute.xlu0 %830
    %832 = vrot.lane.b32.xlu0 %v819, 112
    %v833 = vpop.permute.xlu0 %832
    %v834 = vmul.f32 %v827, %v750
    %v835 = vmul.f32 %v829, %v751
    %v836 = vmul.f32 %v823, %v820
    %v837 = vmul.f32 %v825, %v821
    %v838 = vadd.f32 %v834, %v836
    %v839 = vadd.f32 %v835, %v837
    %v840 = vtanh.pop %v838
    %v841 = vtanh.pop %v839
    %v842 = vmul.f32 %v831, %v840
    %v843 = vmul.f32 %v833, %v841
    %v844 = vsel %vm517, %v842, 0.0
    %v845 = vsel %vm517, %v843, 0.0
    %v846 = vld [vmem:[%s278] sm:$0xff]
    %v847 = vld [vmem:[%s278 + $0x8] sm:$0xff]
    %v848 = vld [vmem:[%s333] sm:$0xff]
    %v849 = vld [vmem:[%s333 + $0x8] sm:$0xff]
    %v850 = vsel %vm518, %v846, %v848
    %v851 = vsel %vm518, %v847, %v849
    %v852 = vpack.c.bf16 %v845, %v844
    %853 = vmatprep.subr.bf16.mxu0 0
    %854 = vmatpush1.bf16.msra.mxu0 %v573
    %855 = vmatprep.subr.bf16.mxu0 0
    %856 = vmatpush1.bf16.msra.mxu0 %v574
    %857 = vmatprep.subr.bf16.mxu0 0
    %858 = vmatpush1.bf16.msra.mxu0 %v575
    %859 = vmatprep.subr.bf16.mxu0 0
    %860 = vmatpush1.bf16.msra.mxu0 %v576
    %861 = vmatprep.subr.bf16.mxu0 0
    %862 = vmatpush1.bf16.msra.mxu0 %v577
    %863 = vmatprep.subr.bf16.mxu0 0
    %864 = vmatpush1.bf16.msra.mxu0 %v578
    %865 = vmatprep.subr.bf16.mxu0 0
    %866 = vmatpush1.bf16.msra.mxu0 %v579
    %867 = vmatprep.subr.bf16.mxu0 0
    %868 = vmatpush1.bf16.msra.mxu0 %v580
    %869 = vmatprep.subr.bf16.mxu0 0
    %870 = vmatpush1.bf16.msra.mxu0 0
    %871 = vmatprep.subr.bf16.mxu0 0
    %872 = vmatpush1.bf16.msra.mxu0 0
    %873 = vmatprep.subr.bf16.mxu0 0
    %874 = vmatpush1.bf16.msra.mxu0 0
    %875 = vmatprep.subr.bf16.mxu0 0
    %876 = vmatpush1.bf16.msra.mxu0 0
    %877 = vmatprep.subr.bf16.mxu0 0
    %878 = vmatpush1.bf16.msra.mxu0 0
    %879 = vmatprep.subr.bf16.mxu0 0
    %880 = vmatpush1.bf16.msra.mxu0 0
    %881 = vmatprep.subr.bf16.mxu0 0
    %882 = vmatpush1.bf16.msra.mxu0 0
    %883 = vmatprep.subr.bf16.mxu0 0
    %884 = vmatpush1.bf16.msra.mxu0 0
    %885 = vmatprep.mubr.bf16.mxu0 0
    %886 = vmatmul.mubr.bf16.gmra.mrb[0].mxu0 %v852
    %v887 = vpop.f32.mrb[0].mxu0
    %v888 = vadd.f32 0.0, %v887
    %v889 = vpop.f32.mrb[0].mxu0
    %v890 = vpop.f32.mrb[0].mxu0
    %v891 = vadd.f32 0.0, %v890
    %v892 = vpop.f32.mrb[0].mxu0
    %893 = vdwg.mxu0
    %v894 = vadd.f32 %v850, %v888
    %v895 = vadd.f32 %v851, %v891
    %v896 = vxor.u32 %v894, 2147483648
    %v897 = vxor.u32 %v895, 2147483648
    %v898 = vmul.f32 %v896, 1.442695
    %v899 = vpow.pop %v898
    %v900 = vmul.f32 %v897, 1.442695
    %v901 = vpow.pop %v900
    %v902 = vadd.f32 %v899, 1.0
    %v903 = vadd.f32 %v901, 1.0
    %v904 = vrcp.pop %v902
    %v905 = vmul.f32 1.0, %v904
    %v906 = vrcp.pop %v903
    %v907 = vmul.f32 1.0, %v906
    %v908 = vtanh.pop %v894
    %v909 = vtanh.pop %v895
    %910 = vrot.lane.b32.xlu0 %v905, 32
    %v911 = vpop.permute.xlu0 %910
    %912 = vrot.lane.b32.xlu0 %v907, 32
    %v913 = vpop.permute.xlu0 %912
    %914 = vrot.lane.b32.xlu0 %v905, 16
    %v915 = vpop.permute.xlu0 %914
    %916 = vrot.lane.b32.xlu0 %v907, 16
    %v917 = vpop.permute.xlu0 %916
    %918 = vrot.lane.b32.xlu0 %v905, 112
    %v919 = vpop.permute.xlu0 %918
    %920 = vrot.lane.b32.xlu0 %v907, 112
    %v921 = vpop.permute.xlu0 %920
    %v922 = vmul.f32 %v915, %v838
    %v923 = vmul.f32 %v917, %v839
    %v924 = vmul.f32 %v911, %v908
    %v925 = vmul.f32 %v913, %v909
    %v926 = vadd.f32 %v922, %v924
    %v927 = vadd.f32 %v923, %v925
    %v928 = vtanh.pop %v926
    %v929 = vtanh.pop %v927
    %v930 = vmul.f32 %v919, %v928
    %v931 = vmul.f32 %v921, %v929
    %v932 = vsel %vm517, %v930, 0.0
    %v933 = vsel %vm517, %v931, 0.0
    %v934 = vsel %vm518, %v848, %v846
    %v935 = vsel %vm518, %v849, %v847
    %v936 = vpack.c.bf16 %v933, %v932
    %937 = vmatprep.subr.bf16.mxu0 0
    %938 = vmatpush1.bf16.msra.mxu0 %v573
    %939 = vmatprep.subr.bf16.mxu0 0
    %940 = vmatpush1.bf16.msra.mxu0 %v574
    %941 = vmatprep.subr.bf16.mxu0 0
    %942 = vmatpush1.bf16.msra.mxu0 %v575
    %943 = vmatprep.subr.bf16.mxu0 0
    %944 = vmatpush1.bf16.msra.mxu0 %v576
    %945 = vmatprep.subr.bf16.mxu0 0
    %946 = vmatpush1.bf16.msra.mxu0 %v577
    %947 = vmatprep.subr.bf16.mxu0 0
    %948 = vmatpush1.bf16.msra.mxu0 %v578
    %949 = vmatprep.subr.bf16.mxu0 0
    %950 = vmatpush1.bf16.msra.mxu0 %v579
    %951 = vmatprep.subr.bf16.mxu0 0
    %952 = vmatpush1.bf16.msra.mxu0 %v580
    %953 = vmatprep.subr.bf16.mxu0 0
    %954 = vmatpush1.bf16.msra.mxu0 0
    %955 = vmatprep.subr.bf16.mxu0 0
    %956 = vmatpush1.bf16.msra.mxu0 0
    %957 = vmatprep.subr.bf16.mxu0 0
    %958 = vmatpush1.bf16.msra.mxu0 0
    %959 = vmatprep.subr.bf16.mxu0 0
    %960 = vmatpush1.bf16.msra.mxu0 0
    %961 = vmatprep.subr.bf16.mxu0 0
    %962 = vmatpush1.bf16.msra.mxu0 0
    %963 = vmatprep.subr.bf16.mxu0 0
    %964 = vmatpush1.bf16.msra.mxu0 0
    %965 = vmatprep.subr.bf16.mxu0 0
    %966 = vmatpush1.bf16.msra.mxu0 0
    %967 = vmatprep.subr.bf16.mxu0 0
    %968 = vmatpush1.bf16.msra.mxu0 0
    %969 = vmatprep.mubr.bf16.mxu0 0
    %970 = vmatmul.mubr.bf16.gmra.mrb[0].mxu0 %v936
    %v971 = vpop.f32.mrb[0].mxu0
    %v972 = vadd.f32 0.0, %v971
    %v973 = vpop.f32.mrb[0].mxu0
    %v974 = vpop.f32.mrb[0].mxu0
    %v975 = vadd.f32 0.0, %v974
    %v976 = vpop.f32.mrb[0].mxu0
    %977 = vdwg.mxu0
    %v978 = vadd.f32 %v934, %v972
    %v979 = vadd.f32 %v935, %v975
    %v980 = vxor.u32 %v978, 2147483648
    %v981 = vxor.u32 %v979, 2147483648
    %v982 = vmul.f32 %v980, 1.442695
    %v983 = vpow.pop %v982
    %v984 = vmul.f32 %v981, 1.442695
    %v985 = vpow.pop %v984
    %v986 = vadd.f32 %v983, 1.0
    %v987 = vadd.f32 %v985, 1.0
    %v988 = vrcp.pop %v986
    %v989 = vmul.f32 1.0, %v988
    %v990 = vrcp.pop %v987
    %v991 = vmul.f32 1.0, %v990
    %v992 = vtanh.pop %v978
    %v993 = vtanh.pop %v979
    %994 = vrot.lane.b32.xlu0 %v989, 32
    %v995 = vpop.permute.xlu0 %994
    %996 = vrot.lane.b32.xlu0 %v991, 32
    %v997 = vpop.permute.xlu0 %996
    %998 = vrot.lane.b32.xlu0 %v989, 16
    %v999 = vpop.permute.xlu0 %998
    %1000 = vrot.lane.b32.xlu0 %v991, 16
    %v1001 = vpop.permute.xlu0 %1000
    %1002 = vrot.lane.b32.xlu0 %v989, 112
    %v1003 = vpop.permute.xlu0 %1002
    %1004 = vrot.lane.b32.xlu0 %v991, 112
    %v1005 = vpop.permute.xlu0 %1004
    %v1006 = vmul.f32 %v999, %v926
    %v1007 = vmul.f32 %v1001, %v927
    %v1008 = vmul.f32 %v995, %v992
    %v1009 = vmul.f32 %v997, %v993
    %v1010 = vadd.f32 %v1006, %v1008
    %v1011 = vadd.f32 %v1007, %v1009
    %v1012 = vtanh.pop %v1010
    %v1013 = vtanh.pop %v1011
    %v1014 = vmul.f32 %v1003, %v1012
    %v1015 = vmul.f32 %v1005, %v1013
    %v1016 = vsel %vm517, %v1014, 0.0
    %v1017 = vsel %vm517, %v1015, 0.0
    %v1018 = vsel %vm518, %v760, %v758
    %v1019 = vsel %vm518, %v761, %v759
    %v1020 = vpack.c.bf16 %v1017, %v1016
    %1021 = vmatprep.subr.bf16.mxu0 0
    %1022 = vmatpush1.bf16.msra.mxu0 %v573
    %1023 = vmatprep.subr.bf16.mxu0 0
    %1024 = vmatpush1.bf16.msra.mxu0 %v574
    %1025 = vmatprep.subr.bf16.mxu0 0
    %1026 = vmatpush1.bf16.msra.mxu0 %v575
    %1027 = vmatprep.subr.bf16.mxu0 0
    %1028 = vmatpush1.bf16.msra.mxu0 %v576
    %1029 = vmatprep.subr.bf16.mxu0 0
    %1030 = vmatpush1.bf16.msra.mxu0 %v577
    %1031 = vmatprep.subr.bf16.mxu0 0
    %1032 = vmatpush1.bf16.msra.mxu0 %v578
    %1033 = vmatprep.subr.bf16.mxu0 0
    %1034 = vmatpush1.bf16.msra.mxu0 %v579
    %1035 = vmatprep.subr.bf16.mxu0 0
    %1036 = vmatpush1.bf16.msra.mxu0 %v580
    %1037 = vmatprep.subr.bf16.mxu0 0
    %1038 = vmatpush1.bf16.msra.mxu0 0
    %1039 = vmatprep.subr.bf16.mxu0 0
    %1040 = vmatpush1.bf16.msra.mxu0 0
    %1041 = vmatprep.subr.bf16.mxu0 0
    %1042 = vmatpush1.bf16.msra.mxu0 0
    %1043 = vmatprep.subr.bf16.mxu0 0
    %1044 = vmatpush1.bf16.msra.mxu0 0
    %1045 = vmatprep.subr.bf16.mxu0 0
    %1046 = vmatpush1.bf16.msra.mxu0 0
    %1047 = vmatprep.subr.bf16.mxu0 0
    %1048 = vmatpush1.bf16.msra.mxu0 0
    %1049 = vmatprep.subr.bf16.mxu0 0
    %1050 = vmatpush1.bf16.msra.mxu0 0
    %1051 = vmatprep.subr.bf16.mxu0 0
    %1052 = vmatpush1.bf16.msra.mxu0 0
    %1053 = vmatprep.mubr.bf16.mxu0 0
    %1054 = vmatmul.mubr.bf16.gmra.mrb[0].mxu0 %v1020
    %v1055 = vpop.f32.mrb[0].mxu0
    %v1056 = vadd.f32 0.0, %v1055
    %v1057 = vpop.f32.mrb[0].mxu0
    %v1058 = vpop.f32.mrb[0].mxu0
    %v1059 = vadd.f32 0.0, %v1058
    %v1060 = vpop.f32.mrb[0].mxu0
    %1061 = vdwg.mxu0
    %v1062 = vadd.f32 %v1018, %v1056
    %v1063 = vadd.f32 %v1019, %v1059
    %v1064 = vxor.u32 %v1062, 2147483648
    %v1065 = vxor.u32 %v1063, 2147483648
    %v1066 = vmul.f32 %v1064, 1.442695
    %v1067 = vpow.pop %v1066
    %v1068 = vmul.f32 %v1065, 1.442695
    %v1069 = vpow.pop %v1068
    %v1070 = vadd.f32 %v1067, 1.0
    %v1071 = vadd.f32 %v1069, 1.0
    %v1072 = vrcp.pop %v1070
    %v1073 = vmul.f32 1.0, %v1072
    %v1074 = vrcp.pop %v1071
    %v1075 = vmul.f32 1.0, %v1074
    %v1076 = vtanh.pop %v1062
    %v1077 = vtanh.pop %v1063
    %1078 = vrot.lane.b32.xlu0 %v1073, 32
    %v1079 = vpop.permute.xlu0 %1078
    %1080 = vrot.lane.b32.xlu0 %v1075, 32
    %v1081 = vpop.permute.xlu0 %1080
    %1082 = vrot.lane.b32.xlu0 %v1073, 16
    %v1083 = vpop.permute.xlu0 %1082
    %1084 = vrot.lane.b32.xlu0 %v1075, 16
    %v1085 = vpop.permute.xlu0 %1084
    %1086 = vrot.lane.b32.xlu0 %v1073, 112
    %v1087 = vpop.permute.xlu0 %1086
    %1088 = vrot.lane.b32.xlu0 %v1075, 112
    %v1089 = vpop.permute.xlu0 %1088
    %v1090 = vmul.f32 %v1083, %v1010
    %v1091 = vmul.f32 %v1085, %v1011
    %v1092 = vmul.f32 %v1079, %v1076
    %v1093 = vmul.f32 %v1081, %v1077
    %v1094 = vadd.f32 %v1090, %v1092
    %v1095 = vadd.f32 %v1091, %v1093
    %v1096 = vtanh.pop %v1094
    %v1097 = vtanh.pop %v1095
    %v1098 = vmul.f32 %v1087, %v1096
    %v1099 = vmul.f32 %v1089, %v1097
    %v1100 = vsel %vm517, %v1098, 0.0
    %v1101 = vsel %vm517, %v1099, 0.0
    %v1102 = vsel %vm518, %v672, %v670
    %v1103 = vsel %vm518, %v673, %v671
    %v1104 = vpack.c.bf16 %v1101, %v1100
    %1105 = vmatprep.subr.bf16.mxu0 0
    %1106 = vmatpush1.bf16.msra.mxu0 %v573
    %1107 = vmatprep.subr.bf16.mxu0 0
    %1108 = vmatpush1.bf16.msra.mxu0 %v574
    %1109 = vmatprep.subr.bf16.mxu0 0
    %1110 = vmatpush1.bf16.msra.mxu0 %v575
    %1111 = vmatprep.subr.bf16.mxu0 0
    %1112 = vmatpush1.bf16.msra.mxu0 %v576
    %1113 = vmatprep.subr.bf16.mxu0 0
    %1114 = vmatpush1.bf16.msra.mxu0 %v577
    %1115 = vmatprep.subr.bf16.mxu0 0
    %1116 = vmatpush1.bf16.msra.mxu0 %v578
    %1117 = vmatprep.subr.bf16.mxu0 0
    %1118 = vmatpush1.bf16.msra.mxu0 %v579
    %1119 = vmatprep.subr.bf16.mxu0 0
    %1120 = vmatpush1.bf16.msra.mxu0 %v580
    %1121 = vmatprep.subr.bf16.mxu0 0
    %1122 = vmatpush1.bf16.msra.mxu0 0
    %1123 = vmatprep.subr.bf16.mxu0 0
    %1124 = vmatpush1.bf16.msra.mxu0 0
    %1125 = vmatprep.subr.bf16.mxu0 0
    %1126 = vmatpush1.bf16.msra.mxu0 0
    %1127 = vmatprep.subr.bf16.mxu0 0
    %1128 = vmatpush1.bf16.msra.mxu0 0
    %1129 = vmatprep.subr.bf16.mxu0 0
    %1130 = vmatpush1.bf16.msra.mxu0 0
    %1131 = vmatprep.subr.bf16.mxu0 0
    %1132 = vmatpush1.bf16.msra.mxu0 0
    %1133 = vmatprep.subr.bf16.mxu0 0
    %1134 = vmatpush1.bf16.msra.mxu0 0
    %1135 = vmatprep.subr.bf16.mxu0 0
    %1136 = vmatpush1.bf16.msra.mxu0 0
    %1137 = vmatprep.mubr.bf16.mxu0 0
    %1138 = vmatmul.mubr.bf16.gmra.mrb[0].mxu0 %v1104
    %v1139 = vpop.f32.mrb[0].mxu0
    %v1140 = vadd.f32 0.0, %v1139
    %v1141 = vpop.f32.mrb[0].mxu0
    %v1142 = vpop.f32.mrb[0].mxu0
    %v1143 = vadd.f32 0.0, %v1142
    %v1144 = vpop.f32.mrb[0].mxu0
    %1145 = vdwg.mxu0
    %v1146 = vadd.f32 %v1102, %v1140
    %v1147 = vadd.f32 %v1103, %v1143
    %v1148 = vxor.u32 %v1146, 2147483648
    %v1149 = vxor.u32 %v1147, 2147483648
    %v1150 = vmul.f32 %v1148, 1.442695
    %v1151 = vpow.pop %v1150
    %v1152 = vmul.f32 %v1149, 1.442695
    %v1153 = vpow.pop %v1152
    %v1154 = vadd.f32 %v1151, 1.0
    %v1155 = vadd.f32 %v1153, 1.0
    %v1156 = vrcp.pop %v1154
    %v1157 = vmul.f32 1.0, %v1156
    %v1158 = vrcp.pop %v1155
    %v1159 = vmul.f32 1.0, %v1158
    %v1160 = vtanh.pop %v1146
    %v1161 = vtanh.pop %v1147
    %1162 = vrot.lane.b32.xlu0 %v1157, 32
    %v1163 = vpop.permute.xlu0 %1162
    %1164 = vrot.lane.b32.xlu0 %v1159, 32
    %v1165 = vpop.permute.xlu0 %1164
    %1166 = vrot.lane.b32.xlu0 %v1157, 16
    %v1167 = vpop.permute.xlu0 %1166
    %1168 = vrot.lane.b32.xlu0 %v1159, 16
    %v1169 = vpop.permute.xlu0 %1168
    %1170 = vrot.lane.b32.xlu0 %v1157, 112
    %v1171 = vpop.permute.xlu0 %1170
    %1172 = vrot.lane.b32.xlu0 %v1159, 112
    %v1173 = vpop.permute.xlu0 %1172
    %v1174 = vmul.f32 %v1167, %v1094
    %v1175 = vmul.f32 %v1169, %v1095
    %v1176 = vmul.f32 %v1163, %v1160
    %v1177 = vmul.f32 %v1165, %v1161
    %v1178 = vadd.f32 %v1174, %v1176
    %v1179 = vadd.f32 %v1175, %v1177
    %v1180 = vtanh.pop %v1178
    %v1181 = vtanh.pop %v1179
    %v1182 = vmul.f32 %v1171, %v1180
    %v1183 = vmul.f32 %v1173, %v1181
    %v1184 = vsel %vm517, %v1182, 0.0
    %v1185 = vsel %vm517, %v1183, 0.0
    %v1186 = vsel %vm518, %v537, %v535
    %v1187 = vsel %vm518, %v538, %v536
    %v1188 = vpack.c.bf16 %v1185, %v1184
    %1189 = vmatprep.subr.bf16.mxu0 0
    %1190 = vmatpush1.bf16.msra.mxu0 %v573
    %1191 = vmatprep.subr.bf16.mxu0 0
    %1192 = vmatpush1.bf16.msra.mxu0 %v574
    %1193 = vmatprep.subr.bf16.mxu0 0
    %1194 = vmatpush1.bf16.msra.mxu0 %v575
    %1195 = vmatprep.subr.bf16.mxu0 0
    %1196 = vmatpush1.bf16.msra.mxu0 %v576
    %1197 = vmatprep.subr.bf16.mxu0 0
    %1198 = vmatpush1.bf16.msra.mxu0 %v577
    %1199 = vmatprep.subr.bf16.mxu0 0
    %1200 = vmatpush1.bf16.msra.mxu0 %v578
    %1201 = vmatprep.subr.bf16.mxu0 0
    %1202 = vmatpush1.bf16.msra.mxu0 %v579
    %1203 = vmatprep.subr.bf16.mxu0 0
    %1204 = vmatpush1.bf16.msra.mxu0 %v580
    %1205 = vmatprep.subr.bf16.mxu0 0
    %1206 = vmatpush1.bf16.msra.mxu0 0
    %1207 = vmatprep.subr.bf16.mxu0 0
    %1208 = vmatpush1.bf16.msra.mxu0 0
    %1209 = vmatprep.subr.bf16.mxu0 0
    %1210 = vmatpush1.bf16.msra.mxu0 0
    %1211 = vmatprep.subr.bf16.mxu0 0
    %1212 = vmatpush1.bf16.msra.mxu0 0
    %1213 = vmatprep.subr.bf16.mxu0 0
    %1214 = vmatpush1.bf16.msra.mxu0 0
    %1215 = vmatprep.subr.bf16.mxu0 0
    %1216 = vmatpush1.bf16.msra.mxu0 0
    %1217 = vmatprep.subr.bf16.mxu0 0
    %1218 = vmatpush1.bf16.msra.mxu0 0
    %1219 = vmatprep.subr.bf16.mxu0 0
    %1220 = vmatpush1.bf16.msra.mxu0 0
    %1221 = vmatprep.mubr.bf16.mxu0 0
    %1222 = vmatmul.mubr.bf16.gmra.mrb[0].mxu0 %v1188
    %v1223 = vpop.f32.mrb[0].mxu0
    %v1224 = vadd.f32 0.0, %v1223
    %v1225 = vpop.f32.mrb[0].mxu0
    %v1226 = vpop.f32.mrb[0].mxu0
    %v1227 = vadd.f32 0.0, %v1226
    %v1228 = vpop.f32.mrb[0].mxu0
    %1229 = vdwg.mxu0
    %v1230 = vadd.f32 %v1186, %v1224
    %v1231 = vadd.f32 %v1187, %v1227
    %v1232 = vxor.u32 %v1230, 2147483648
    %v1233 = vxor.u32 %v1231, 2147483648
    %v1234 = vmul.f32 %v1232, 1.442695
    %v1235 = vpow.pop %v1234
    %v1236 = vmul.f32 %v1233, 1.442695
    %v1237 = vpow.pop %v1236
    %v1238 = vadd.f32 %v1235, 1.0
    %v1239 = vadd.f32 %v1237, 1.0
    %v1240 = vrcp.pop %v1238
    %v1241 = vmul.f32 1.0, %v1240
    %v1242 = vrcp.pop %v1239
    %v1243 = vmul.f32 1.0, %v1242
    %v1244 = vtanh.pop %v1230
    %v1245 = vtanh.pop %v1231
    %1246 = vrot.lane.b32.xlu0 %v1241, 32
    %v1247 = vpop.permute.xlu0 %1246
    %1248 = vrot.lane.b32.xlu0 %v1243, 32
    %v1249 = vpop.permute.xlu0 %1248
    %1250 = vrot.lane.b32.xlu0 %v1241, 16
    %v1251 = vpop.permute.xlu0 %1250
    %1252 = vrot.lane.b32.xlu0 %v1243, 16
    %v1253 = vpop.permute.xlu0 %1252
    %1254 = vrot.lane.b32.xlu0 %v1241, 112
    %v1255 = vpop.permute.xlu0 %1254
    %1256 = vrot.lane.b32.xlu0 %v1243, 112
    %v1257 = vpop.permute.xlu0 %1256
    %v1258 = vmul.f32 %v1251, %v1178
    %v1259 = vmul.f32 %v1253, %v1179
    %v1260 = vmul.f32 %v1247, %v1244
    %v1261 = vmul.f32 %v1249, %v1245
    %v1262 = vadd.f32 %v1258, %v1260
    %v1263 = vadd.f32 %v1259, %v1261
    %v1264 = vtanh.pop %v1262
    %v1265 = vtanh.pop %v1263
    %v1266 = vmul.f32 %v1255, %v1264
    %v1267 = vmul.f32 %v1257, %v1265
    %v1268 = vsel %vm517, %v1266, 0.0
    %v1269 = vsel %vm517, %v1267, 0.0
    %v1270 = vpack.c.bf16 %v1269, %v1268
    %v1271 = vld [vmem:[%s4] sm:$0xf]
    %v1272 = vld [vmem:[%s4 + $0x4] sm:$0xf]
    %v1273 = vld [vmem:[%s4 + $0x8] sm:$0xf]
    %v1274 = vld [vmem:[%s4 + $0xc] sm:$0xf]
    %v1275 = vld [vmem:[%s4 + $0x10] sm:$0xf]
    %v1276 = vld [vmem:[%s4 + $0x14] sm:$0xf]
    %v1277 = vld [vmem:[%s4 + $0x18] sm:$0xf]
    %v1278 = vld [vmem:[%s4 + $0x1c] sm:$0xf]
    %v1279 = vld [vmem:[%s4 + $0x20] sm:$0xf]
    %v1280 = vld [vmem:[%s4 + $0x24] sm:$0xf]
    %v1281 = vld [vmem:[%s4 + $0x28] sm:$0xf]
    %v1282 = vld [vmem:[%s4 + $0x2c] sm:$0xf]
    %v1283 = vld [vmem:[%s4 + $0x30] sm:$0xf]
    %v1284 = vld [vmem:[%s4 + $0x34] sm:$0xf]
    %v1285 = vld [vmem:[%s4 + $0x38] sm:$0xf]
    %v1286 = vld [vmem:[%s4 + $0x3c] sm:$0xf]
    %v1287 = vld [vmem:[%s5] sm:$0x1]
    %v1289 = vlaneseq
    %v1290 = vshrl.u32 %v1289, 7
    %v1291 = vsub.s32 0, %v1290
    %v1292 = vrot.slane %v1287, %v1291
    %v1310 = vunpack.c.l.b16 %v1271
    %v1311 = vunpack.c.l.b16 %v1272
    %v1312 = vunpack.c.l.b16 %v1273
    %v1313 = vunpack.c.l.b16 %v1274
    %v1314 = vunpack.c.l.b16 %v1275
    %v1315 = vunpack.c.l.b16 %v1276
    %v1316 = vunpack.c.l.b16 %v1277
    %v1317 = vunpack.c.l.b16 %v1278
    %v1318 = vunpack.c.l.b16 %v1279
    %v1319 = vunpack.c.l.b16 %v1280
    %v1320 = vunpack.c.l.b16 %v1281
    %v1321 = vunpack.c.l.b16 %v1282
    %v1322 = vunpack.c.l.b16 %v1283
    %v1323 = vunpack.c.l.b16 %v1284
    %v1324 = vunpack.c.l.b16 %v1285
    %v1325 = vunpack.c.l.b16 %v1286
    %v1326 = vpack.c.b16 %v1311, %v1310
    %v1327 = vpack.c.b16 %v1313, %v1312
    %v1328 = vpack.c.b16 %v1315, %v1314
    %v1329 = vpack.c.b16 %v1317, %v1316
    %v1330 = vpack.c.b16 %v1319, %v1318
    %v1331 = vpack.c.b16 %v1321, %v1320
    %v1332 = vpack.c.b16 %v1323, %v1322
    %v1333 = vpack.c.b16 %v1325, %v1324
    %1342 = vmatprep.subr.bf16.mxu0 0
    %1343 = vmatpush1.bf16.msra.mxu0 %v1326
    %1344 = vmatprep.subr.bf16.mxu0 0
    %1345 = vmatpush1.bf16.msra.mxu0 %v1327
    %1346 = vmatprep.subr.bf16.mxu0 0
    %1347 = vmatpush1.bf16.msra.mxu0 %v1328
    %1348 = vmatprep.subr.bf16.mxu0 0
    %1349 = vmatpush1.bf16.msra.mxu0 %v1329
    %1350 = vmatprep.subr.bf16.mxu0 0
    %1351 = vmatpush1.bf16.msra.mxu0 %v1330
    %1352 = vmatprep.subr.bf16.mxu0 0
    %1353 = vmatpush1.bf16.msra.mxu0 %v1331
    %1354 = vmatprep.subr.bf16.mxu0 0
    %1355 = vmatpush1.bf16.msra.mxu0 %v1332
    %1356 = vmatprep.subr.bf16.mxu0 0
    %1357 = vmatpush1.bf16.msra.mxu0 %v1333
    %1358 = vmatprep.subr.bf16.mxu0 0
    %1359 = vmatpush1.bf16.msra.mxu0 0
    %1360 = vmatprep.subr.bf16.mxu0 0
    %1361 = vmatpush1.bf16.msra.mxu0 0
    %1362 = vmatprep.subr.bf16.mxu0 0
    %1363 = vmatpush1.bf16.msra.mxu0 0
    %1364 = vmatprep.subr.bf16.mxu0 0
    %1365 = vmatpush1.bf16.msra.mxu0 0
    %1366 = vmatprep.subr.bf16.mxu0 0
    %1367 = vmatpush1.bf16.msra.mxu0 0
    %1368 = vmatprep.subr.bf16.mxu0 0
    %1369 = vmatpush1.bf16.msra.mxu0 0
    %1370 = vmatprep.subr.bf16.mxu0 0
    %1371 = vmatpush1.bf16.msra.mxu0 0
    %1372 = vmatprep.subr.bf16.mxu0 0
    %1373 = vmatpush1.bf16.msra.mxu0 0
    %1374 = vmatprep.mubr.bf16.mxu0 0
    %1375 = vmatmul.mubr.bf16.gmra.mrb[0].mxu0 %v1270
    %v1376 = vpop.f32.mrb[0].mxu0
    %v1377 = vadd.f32 %v1292, %v1376
    %v1378 = vpop.f32.mrb[0].mxu0
    %v1379 = vpop.f32.mrb[0].mxu0
    %v1380 = vadd.f32 %v1292, %v1379
    %v1381 = vpop.f32.mrb[0].mxu0
    %1382 = vdwg.mxu0
    %v1383 = vmul.f32 %v1377, 0.17677669
    %v1384 = vmul.f32 %v1380, 0.17677669
    %v1385 = vpack.c.bf16 %v1384, %v1383
    %v1387 = vunpack.c.l.b16 %v1385
    %v1388 = vunpack.c.h.b16 %v1385
    %v1389 = vpack.c.b16 %v1387, %v1387
    %v1390 = vpack.c.b16 %v1388, %v1388
    %v1391 = vpack.c.bf16 %v1380, %v1377
    %v1393 = vunpack.c.l.b16 %v1391
    %v1394 = vunpack.c.h.b16 %v1391
    %v1395 = vpack.c.b16 %v1393, %v1393
    %1396 = vrot.lane.b32.xlu0 %v1395, 96
    %v1397 = vpop.permute.xlu0 %1396
    %v1399 = vsel %vm69, %v1389, 0
    %v1402 = vsel %vm69, %v1397, 0
    %1404 = vmatprep.subr.bf16.mxu0 0
    %1405 = vmatpush1.bf16.xpose.msra.mxu0 %v1402
    %1406 = vmatprep.subr.bf16.mxu0 0
    %1407 = vmatpush1.bf16.xpose.msra.mxu0 0
    %1408 = vmatprep.subr.bf16.mxu0 0
    %1409 = vmatpush1.bf16.xpose.msra.mxu0 0
    %1410 = vmatprep.subr.bf16.mxu0 0
    %1411 = vmatpush1.bf16.xpose.msra.mxu0 0
    %1412 = vmatprep.subr.bf16.mxu0 0
    %1413 = vmatpush1.bf16.xpose.msra.mxu0 0
    %1414 = vmatprep.subr.bf16.mxu0 0
    %1415 = vmatpush1.bf16.xpose.msra.mxu0 0
    %1416 = vmatprep.subr.bf16.mxu0 0
    %1417 = vmatpush1.bf16.xpose.msra.mxu0 0
    %1418 = vmatprep.subr.bf16.mxu0 0
    %1419 = vmatpush1.bf16.xpose.msra.mxu0 0
    %1420 = vmatprep.subr.bf16.mxu0 0
    %1421 = vmatpush1.bf16.xpose.msra.mxu0 0
    %1422 = vmatprep.subr.bf16.mxu0 0
    %1423 = vmatpush1.bf16.xpose.msra.mxu0 0
    %1424 = vmatprep.subr.bf16.mxu0 0
    %1425 = vmatpush1.bf16.xpose.msra.mxu0 0
    %1426 = vmatprep.subr.bf16.mxu0 0
    %1427 = vmatpush1.bf16.xpose.msra.mxu0 0
    %1428 = vmatprep.subr.bf16.mxu0 0
    %1429 = vmatpush1.bf16.xpose.msra.mxu0 0
    %1430 = vmatprep.subr.bf16.mxu0 0
    %1431 = vmatpush1.bf16.xpose.msra.mxu0 0
    %1432 = vmatprep.subr.bf16.mxu0 0
    %1433 = vmatpush1.bf16.xpose.msra.mxu0 0
    %1434 = vmatprep.subr.bf16.mxu0 0
    %1435 = vmatpush1.bf16.xpose.msra.mxu0 0
    %1436 = vmatprep.mubr.bf16.mxu0 0
    %1437 = vmatmul.mubr.bf16.gmra.mrb[0].mxu0 %v1399
    %v1438 = vpop.f32.mrb[0].mxu0
    %v1439 = vadd.f32 0.0, %v1438
    %v1440 = vpop.f32.mrb[0].mxu0
    %v1441 = vpop.f32.mrb[0].mxu0
    %v1442 = vpop.f32.mrb[0].mxu0
    %1443 = vdwg.mxu0
    %v1444 = vpack.c.b16 %v1394, %v1394
    %1445 = vrot.lane.b32.xlu0 %v1444, 96
    %v1446 = vpop.permute.xlu0 %1445
    %v1448 = vsel %vm69, %v1390, 0
    %v1451 = vsel %vm69, %v1446, 0
    %1453 = vmatprep.subr.bf16.mxu0 0
    %1454 = vmatpush1.bf16.xpose.msra.mxu0 %v1451
    %1455 = vmatprep.subr.bf16.mxu0 0
    %1456 = vmatpush1.bf16.xpose.msra.mxu0 0
    %1457 = vmatprep.subr.bf16.mxu0 0
    %1458 = vmatpush1.bf16.xpose.msra.mxu0 0
    %1459 = vmatprep.subr.bf16.mxu0 0
    %1460 = vmatpush1.bf16.xpose.msra.mxu0 0
    %1461 = vmatprep.subr.bf16.mxu0 0
    %1462 = vmatpush1.bf16.xpose.msra.mxu0 0
    %1463 = vmatprep.subr.bf16.mxu0 0
    %1464 = vmatpush1.bf16.xpose.msra.mxu0 0
    %1465 = vmatprep.subr.bf16.mxu0 0
    %1466 = vmatpush1.bf16.xpose.msra.mxu0 0
    %1467 = vmatprep.subr.bf16.mxu0 0
    %1468 = vmatpush1.bf16.xpose.msra.mxu0 0
    %1469 = vmatprep.subr.bf16.mxu0 0
    %1470 = vmatpush1.bf16.xpose.msra.mxu0 0
    %1471 = vmatprep.subr.bf16.mxu0 0
    %1472 = vmatpush1.bf16.xpose.msra.mxu0 0
    %1473 = vmatprep.subr.bf16.mxu0 0
    %1474 = vmatpush1.bf16.xpose.msra.mxu0 0
    %1475 = vmatprep.subr.bf16.mxu0 0
    %1476 = vmatpush1.bf16.xpose.msra.mxu0 0
    %1477 = vmatprep.subr.bf16.mxu0 0
    %1478 = vmatpush1.bf16.xpose.msra.mxu0 0
    %1479 = vmatprep.subr.bf16.mxu0 0
    %1480 = vmatpush1.bf16.xpose.msra.mxu0 0
    %1481 = vmatprep.subr.bf16.mxu0 0
    %1482 = vmatpush1.bf16.xpose.msra.mxu0 0
    %1483 = vmatprep.subr.bf16.mxu0 0
    %1484 = vmatpush1.bf16.xpose.msra.mxu0 0
    %1485 = vmatprep.mubr.bf16.mxu0 0
    %1486 = vmatmul.mubr.bf16.gmra.mrb[0].mxu0 %v1448
    %v1487 = vpop.f32.mrb[0].mxu0
    %v1488 = vadd.f32 0.0, %v1487
    %v1489 = vpop.f32.mrb[0].mxu0
    %v1490 = vpop.f32.mrb[0].mxu0
    %v1491 = vpop.f32.mrb[0].mxu0
    %1492 = vdwg.mxu0
    %vm1493 = vcmask 64512
    %v1494 = vsel %vm1493, %v1439, -inf
    %1495 = vmax.xlane.f32.xlu0 %v1494
    %v1496 = vpop.xlane.xlu0 %1495
    %v1497 = vsel %vm1493, %v1488, -inf
    %1498 = vmax.xlane.f32.xlu0 %v1497
    %v1499 = vpop.xlane.xlu0 %1498
    %v1500 = vsub.f32 %v1439, %v1496
    %v1501 = vsub.f32 %v1488, %v1499
    %v1502 = vmul.f32 %v1500, 1.442695
    %v1503 = vpow.pop %v1502
    %v1504 = vmul.f32 %v1501, 1.442695
    %v1505 = vpow.pop %v1504
    %v1506 = vsel %vm1493, %v1503, 0.0
    %1507 = vadd.xlane.f32.xlu0 %v1506
    %v1508 = vpop.xlane.xlu0 %1507
    %v1509 = vsel %vm1493, %v1505, 0.0
    %1510 = vadd.xlane.f32.xlu0 %v1509
    %v1511 = vpop.xlane.xlu0 %1510
    %v1512 = vrcp.pop %v1508
    %v1513 = vmul.f32 %v1503, %v1512
    %v1514 = vrcp.pop %v1511
    %v1515 = vmul.f32 %v1505, %v1514
    %v1516 = vpack.c.bf16 %v1513, %v1513
    %v1517 = vpack.c.bf16 %v1515, %v1515
    %1518 = vrot.lane.b32.xlu0 %v1395, 64
    %v1519 = vpop.permute.xlu0 %1518
    %v1521 = vsel %vm1493, %v1516, 0
    %vm1523 = vcmask 1043456
    %v1525 = vsel %vm1523, %v1519, 0
    %1527 = vmatprep.subr.bf16.mxu0 0
    %1528 = vmatpush1.bf16.msra.mxu0 %v1525
    %1529 = vmatprep.subr.bf16.mxu0 0
    %1530 = vmatpush1.bf16.msra.mxu0 0
    %1531 = vmatprep.subr.bf16.mxu0 0
    %1532 = vmatpush1.bf16.msra.mxu0 0
    %1533 = vmatprep.subr.bf16.mxu0 0
    %1534 = vmatpush1.bf16.msra.mxu0 0
    %1535 = vmatprep.subr.bf16.mxu0 0
    %1536 = vmatpush1.bf16.msra.mxu0 0
    %1537 = vmatprep.subr.bf16.mxu0 0
    %1538 = vmatpush1.bf16.msra.mxu0 0
    %1539 = vmatprep.subr.bf16.mxu0 0
    %1540 = vmatpush1.bf16.msra.mxu0 0
    %1541 = vmatprep.subr.bf16.mxu0 0
    %1542 = vmatpush1.bf16.msra.mxu0 0
    %1543 = vmatprep.subr.bf16.mxu0 0
    %1544 = vmatpush1.bf16.msra.mxu0 0
    %1545 = vmatprep.subr.bf16.mxu0 0
    %1546 = vmatpush1.bf16.msra.mxu0 0
    %1547 = vmatprep.subr.bf16.mxu0 0
    %1548 = vmatpush1.bf16.msra.mxu0 0
    %1549 = vmatprep.subr.bf16.mxu0 0
    %1550 = vmatpush1.bf16.msra.mxu0 0
    %1551 = vmatprep.subr.bf16.mxu0 0
    %1552 = vmatpush1.bf16.msra.mxu0 0
    %1553 = vmatprep.subr.bf16.mxu0 0
    %1554 = vmatpush1.bf16.msra.mxu0 0
    %1555 = vmatprep.subr.bf16.mxu0 0
    %1556 = vmatpush1.bf16.msra.mxu0 0
    %1557 = vmatprep.subr.bf16.mxu0 0
    %1558 = vmatpush1.bf16.msra.mxu0 0
    %1559 = vmatprep.mubr.bf16.mxu0 0
    %1560 = vmatmul.mubr.bf16.gmra.mrb[0].mxu0 %v1521
    %v1561 = vpop.f32.mrb[0].mxu0
    %v1562 = vadd.f32 0.0, %v1561
    %v1563 = vpop.f32.mrb[0].mxu0
    %v1564 = vpop.f32.mrb[0].mxu0
    %v1565 = vpop.f32.mrb[0].mxu0
    %1566 = vdwg.mxu0
    %1567 = vrot.lane.b32.xlu0 %v1444, 64
    %v1568 = vpop.permute.xlu0 %1567
    %v1570 = vsel %vm1493, %v1517, 0
    %v1573 = vsel %vm1523, %v1568, 0
    %1575 = vmatprep.subr.bf16.mxu0 0
    %1576 = vmatpush1.bf16.msra.mxu0 %v1573
    %1577 = vmatprep.subr.bf16.mxu0 0
    %1578 = vmatpush1.bf16.msra.mxu0 0
    %1579 = vmatprep.subr.bf16.mxu0 0
    %1580 = vmatpush1.bf16.msra.mxu0 0
    %1581 = vmatprep.subr.bf16.mxu0 0
    %1582 = vmatpush1.bf16.msra.mxu0 0
    %1583 = vmatprep.subr.bf16.mxu0 0
    %1584 = vmatpush1.bf16.msra.mxu0 0
    %1585 = vmatprep.subr.bf16.mxu0 0
    %1586 = vmatpush1.bf16.msra.mxu0 0
    %1587 = vmatprep.subr.bf16.mxu0 0
    %1588 = vmatpush1.bf16.msra.mxu0 0
    %1589 = vmatprep.subr.bf16.mxu0 0
    %1590 = vmatpush1.bf16.msra.mxu0 0
    %1591 = vmatprep.subr.bf16.mxu0 0
    %1592 = vmatpush1.bf16.msra.mxu0 0
    %1593 = vmatprep.subr.bf16.mxu0 0
    %1594 = vmatpush1.bf16.msra.mxu0 0
    %1595 = vmatprep.subr.bf16.mxu0 0
    %1596 = vmatpush1.bf16.msra.mxu0 0
    %1597 = vmatprep.subr.bf16.mxu0 0
    %1598 = vmatpush1.bf16.msra.mxu0 0
    %1599 = vmatprep.subr.bf16.mxu0 0
    %1600 = vmatpush1.bf16.msra.mxu0 0
    %1601 = vmatprep.subr.bf16.mxu0 0
    %1602 = vmatpush1.bf16.msra.mxu0 0
    %1603 = vmatprep.subr.bf16.mxu0 0
    %1604 = vmatpush1.bf16.msra.mxu0 0
    %1605 = vmatprep.subr.bf16.mxu0 0
    %1606 = vmatpush1.bf16.msra.mxu0 0
    %1607 = vmatprep.mubr.bf16.mxu0 0
    %1608 = vmatmul.mubr.bf16.gmra.mrb[0].mxu0 %v1570
    %v1609 = vpop.f32.mrb[0].mxu0
    %v1610 = vadd.f32 0.0, %v1609
    %v1611 = vpop.f32.mrb[0].mxu0
    %v1612 = vpop.f32.mrb[0].mxu0
    %v1613 = vpop.f32.mrb[0].mxu0
    %1614 = vdwg.mxu0
    %1615 = vst.msk [vmem:[#allocation6] sm:$0xff] %vm69, %v1562
    %1616 = vst.msk [vmem:[#allocation6 + $0x8] sm:$0xff] %vm69, %v1610
    // Predicated region
    $region30: #{tpu_custom_call.1} parent=1 // pred_check
      _
    $region31: #{tpu_custom_call.1} parent=1 // pred_check_branch
      %1618 = sbr.rel (0) target = $region33
    $region32: #{tpu_custom_call.1} parent=1 // pred_region
      %s1620 = ssub.s32 256, 256
      %1621 = vsyncadd [#allocation5], %s1620
      %s1622 = sshll.u32 [#allocation6], 4
      %s1623 = int_to_ptr.vmem [resolvable:$true] %s1622
      %1628 = dma.vmem_to_hbm [thread:$0]  %s1623, 256, %s6, [#allocation5], 128, 128, 8
    $region33: #{tpu_custom_call.1} parent=1 // pred_fallthru
      _
    // Predicated region
    $region34: #{tpu_custom_call.1} parent=1 // pred_check
      _
    $region35: #{tpu_custom_call.1} parent=1 // pred_check_branch
      %1630 = sbr.rel (0) target = $region37
    $region36: #{tpu_custom_call.1} parent=1 // pred_region
      %1631 = dma.done [#allocation5], 256
    $region37: #{tpu_custom_call.1} parent=1 // pred_fallthru
      _
    %1632 = vsyncpa [#allocation4], 1
    %1633 = vsyncpa [#allocation5], 1

</llo_original>
